<compile_context>
chip_gen: v7x
topology: tpu7x:2x2x1
jax: 0.10.0
libtpu: 0.0.40
codegen_flags: <defaults>
</compile_context>

<pallas_src>
import functools
import math

import jax
import jax.numpy as jnp
import numpy as np
from jax import lax
from jax.experimental import pallas as pl
from jax.experimental.pallas import tpu as pltpu

VMEM_LIMIT = 64 * 1024 * 1024  # safe on v5e/v6e (128 MiB) and v7x (64 MiB per TC)


def _tile(dim, target, align):
    """Largest block size <= target that divides `dim` and is `align`-aligned.

    Falls back to the full dim (always a legal block) when dim <= target or no
    aligned divisor exists.
    """
    if dim <= target:
        return dim
    t = (target // align) * align
    while t >= align:
        if dim % t == 0:
            return t
        t -= align
    return dim


# --------------------- Fused LayerNorm + linear (+gelu) --------------------- #

def make_ln_linear_kernel(activation):
    def kernel(x_ref, g_ref, b_ref, w_ref, bias_ref, o_ref):
        x = x_ref[...].astype(jnp.float32)
        mu = jnp.mean(x, axis=-1, keepdims=True)
        xc = x - mu
        var = jnp.mean(xc * xc, axis=-1, keepdims=True)
        inv = lax.rsqrt(var + 1e-5)                         # nn.LayerNorm default eps
        xn = xc * inv * g_ref[...].astype(jnp.float32) + b_ref[...].astype(jnp.float32)
        y = jnp.dot(xn.astype(w_ref.dtype), w_ref[...],
                    preferred_element_type=jnp.float32)
        y = y + bias_ref[...].astype(jnp.float32)
        if activation == "gelu_tanh":
            y = jax.nn.gelu(y, approximate=True)            # == F.gelu(approximate='tanh')
        o_ref[...] = y.astype(o_ref.dtype)

    return kernel


def ln_linear(x2d, gamma, beta, w, b, activation=None,
              tm_target=256, tn_target=512):
    """y = act(LayerNorm(x) @ w + b).  x:(M,K) w:(K,N) b:(N,).  Full-K blocks."""
    M, K = x2d.shape
    K2, N = w.shape
    assert K == K2
    tm = _tile(M, tm_target, 8)
    tn = _tile(N, tn_target, 128)
    g2d = gamma.reshape(1, K)
    be2d = beta.reshape(1, K)
    b2d = b.reshape(1, N)

    flops = 2 * M * N * K
    transc = (M * N if activation == "gelu_tanh" else 0) + M
    bytes_accessed = 4 * (M * K * (N // tn) + K * N + 2 * K + N + M * N)

    return pl.pallas_call(
        make_ln_linear_kernel(activation),
        out_shape=jax.ShapeDtypeStruct((M, N), x2d.dtype),
        grid=(M // tm, N // tn),
        in_specs=[
            pl.BlockSpec((tm, K), lambda i, j: (i, 0)),
            pl.BlockSpec((1, K), lambda i, j: (0, 0)),
            pl.BlockSpec((1, K), lambda i, j: (0, 0)),
            pl.BlockSpec((K, tn), lambda i, j: (0, j)),
            pl.BlockSpec((1, tn), lambda i, j: (0, j)),
        ],
        out_specs=pl.BlockSpec((tm, tn), lambda i, j: (i, j)),
        compiler_params=pltpu.CompilerParams(
            dimension_semantics=("parallel", "parallel"),
            vmem_limit_bytes=VMEM_LIMIT),
        cost_estimate=pl.CostEstimate(
            flops=flops, transcendentals=transc, bytes_accessed=bytes_accessed),
    )(x2d, g2d, be2d, w, b2d)


# ------------------------ Tiled linear (+residual) -------------------------- #

def make_linear_kernel(has_residual):
    def kernel(*refs):
        if has_residual:
            x_ref, w_ref, b_ref, r_ref, o_ref, acc_ref = refs
        else:
            x_ref, w_ref, b_ref, o_ref, acc_ref = refs
            r_ref = None

        @pl.when(pl.program_id(2) == 0)
        def _():
            acc_ref[...] = jnp.zeros_like(acc_ref)

        acc_ref[...] += jnp.dot(x_ref[...], w_ref[...],
                                preferred_element_type=jnp.float32)

        @pl.when(pl.program_id(2) == pl.num_programs(2) - 1)
        def _():
            y = acc_ref[...] + b_ref[...].astype(jnp.float32)
            if has_residual:
                y = y + r_ref[...].astype(jnp.float32)
            o_ref[...] = y.astype(o_ref.dtype)

    return kernel


def linear(x2d, w, b, residual=None,
           tm_target=256, tn_target=512, tk_target=1024):
    """y = x @ w + b [+ residual].  x:(M,K) w:(K,N) b:(N,) residual:(M,N)."""
    M, K = x2d.shape
    K2, N = w.shape
    assert K == K2
    tm = _tile(M, tm_target, 8)
    tn = _tile(N, tn_target, 128)
    tk = _tile(K, tk_target, 128)
    b2d = b.reshape(1, N)

    in_specs = [
        pl.BlockSpec((tm, tk), lambda i, j, k: (i, k)),
        pl.BlockSpec((tk, tn), lambda i, j, k: (k, j)),
        pl.BlockSpec((1, tn), lambda i, j, k: (0, j)),
    ]
    inputs = [x2d, w, b2d]
    if residual is not None:
        in_specs.append(pl.BlockSpec((tm, tn), lambda i, j, k: (i, j)))
        inputs.append(residual)

    flops = 2 * M * N * K
    bytes_accessed = 4 * (M * K + K * N + N + M * N
                          + (M * N if residual is not None else 0))

    return pl.pallas_call(
        make_linear_kernel(residual is not None),
        out_shape=jax.ShapeDtypeStruct((M, N), x2d.dtype),
        grid_spec=pltpu.PrefetchScalarGridSpec(
            num_scalar_prefetch=0,
            grid=(M // tm, N // tn, K // tk),
            in_specs=in_specs,
            out_specs=pl.BlockSpec((tm, tn), lambda i, j, k: (i, j)),
            scratch_shapes=[pltpu.VMEM((tm, tn), jnp.float32)]),
        compiler_params=pltpu.CompilerParams(
            dimension_semantics=("parallel", "parallel", "arbitrary"),
            vmem_limit_bytes=VMEM_LIMIT),
        cost_estimate=pl.CostEstimate(
            flops=flops, transcendentals=0, bytes_accessed=bytes_accessed),
    )(*inputs)


# ------------------------ Flash attention (online softmax) ------------------ #

def make_flash_kernel(scale):
    def kernel(q_ref, k_ref, v_ref, mask_ref, o_ref, m_sc, l_sc, acc_sc):
        ki = pl.program_id(3)

        @pl.when(ki == 0)
        def _():
            m_sc[...] = jnp.full_like(m_sc, -jnp.inf)
            l_sc[...] = jnp.zeros_like(l_sc)
            acc_sc[...] = jnp.zeros_like(acc_sc)

        q = q_ref[...].astype(jnp.float32) * scale            # fold scale into q
        k = k_ref[...].astype(jnp.float32)
        # q @ k^T contracting last dims: no materialized transpose of k.
        s = lax.dot_general(q, k, (((1,), (1,)), ((), ())),
                            preferred_element_type=jnp.float32)   # (tq, tk)
        s = jnp.where(mask_ref[...] != 0.0, s, jnp.float32(-1e30))

        m_prev = m_sc[...]
        m_new = jnp.maximum(m_prev, jnp.max(s, axis=-1, keepdims=True))
        alpha = jnp.exp(m_prev - m_new)
        p = jnp.exp(s - m_new)
        l_sc[...] = alpha * l_sc[...] + jnp.sum(p, axis=-1, keepdims=True)
        acc_sc[...] = alpha * acc_sc[...] + jnp.dot(
            p.astype(v_ref.dtype), v_ref[...], preferred_element_type=jnp.float32)
        m_sc[...] = m_new

        @pl.when(ki == pl.num_programs(3) - 1)
        def _():
            inv_l = pl.reciprocal(l_sc[...], approx=True)     # EUP slot, ~free
            o_ref[...] = (acc_sc[...] * inv_l).astype(o_ref.dtype)

    return kernel


def flash_sdpa(q, k, v, mask, scale, tq_target=256, tk_target=512):
    """q,k,v: (B,H,S,Hd); mask: (B,1,S,S) float (1=attend) -> (B,H,S,Hd)."""
    B, H, S, Hd = q.shape
    tq = _tile(S, tq_target, 8)
    tk = _tile(S, tk_target, 128)

    qo_spec = pl.BlockSpec((None, None, tq, Hd), lambda b, h, qi, ki: (b, h, qi, 0))
    kv_spec = pl.BlockSpec((None, None, tk, Hd), lambda b, h, qi, ki: (b, h, ki, 0))
    mask_spec = pl.BlockSpec((None, None, tq, tk), lambda b, h, qi, ki: (b, 0, qi, ki))

    flops = 4 * B * H * S * S * Hd
    transc = B * H * S * S
    bytes_accessed = 4 * (4 * B * H * S * Hd + B * H * S * S)

    return pl.pallas_call(
        make_flash_kernel(scale),
        out_shape=jax.ShapeDtypeStruct((B, H, S, Hd), q.dtype),
        grid_spec=pltpu.PrefetchScalarGridSpec(
            num_scalar_prefetch=0,
            grid=(B, H, S // tq, S // tk),
            in_specs=[qo_spec, kv_spec, kv_spec, mask_spec],
            out_specs=qo_spec,
            scratch_shapes=[pltpu.VMEM((tq, 1), jnp.float32),   # running max m
                            pltpu.VMEM((tq, 1), jnp.float32),   # running denom l
                            pltpu.VMEM((tq, Hd), jnp.float32)]  # running acc
        ),
        compiler_params=pltpu.CompilerParams(
            dimension_semantics=("parallel", "parallel", "parallel", "arbitrary"),
            vmem_limit_bytes=VMEM_LIMIT),
        cost_estimate=pl.CostEstimate(
            flops=flops, transcendentals=transc, bytes_accessed=bytes_accessed),
    )(q, k, v, mask)


# ---------------------------- TransformerBlock ------------------------------ #

def transformer_block_forward(x, mask, params, n_head, input_pos=None):
    """x: (B,S,D) f32, mask: (B,1,S,S) f32 (1.0 attend / 0.0 masked)."""
    del input_pos  # only used by the kv_cache path; kv_cache is None here
    B, S, D = x.shape
    Hd = D // n_head
    scale = 1.0 / math.sqrt(Hd)
    x2d = x.reshape(B * S, D)

    # h = x + attn.c_proj( sdpa( split( attn.c_attn( ln_1(x) ) ) ) )
    qkv = ln_linear(x2d, params["ln1_g"], params["ln1_b"],
                    params["w_attn"], params["b_attn"])             # (B*S, 3D)
    qkv = qkv.reshape(B, S, 3, n_head, Hd)
    q = qkv[:, :, 0].transpose(0, 2, 1, 3)                          # (B,H,S,Hd)
    k = qkv[:, :, 1].transpose(0, 2, 1, 3)
    v = qkv[:, :, 2].transpose(0, 2, 1, 3)
    y = flash_sdpa(q, k, v, mask[:, :, :, :S], scale)               # (B,H,S,Hd)
    y2d = y.transpose(0, 2, 1, 3).reshape(B * S, D)
    h2d = linear(y2d, params["w_proj"], params["b_proj"], residual=x2d)

    # out = h + mlp.c_proj( gelu_tanh( mlp.c_fc( ln_2(h) ) ) )
    ff = ln_linear(h2d, params["ln2_g"], params["ln2_b"],
                   params["w_fc"], params["b_fc"], activation="gelu_tanh")
    out2d = linear(ff, params["w_proj2"], params["b_proj2"], residual=h2d)
    return out2d.reshape(B, S, D)


# ------------------------------ reference (JAX) ----------------------------- #

def transformer_block_reference(x, mask, params, n_head):
    B, S, D = x.shape
    Hd = D // n_head

    def ln(t, g, b):
        mu = jnp.mean(t, -1, keepdims=True)
        var = jnp.mean((t - mu) ** 2, -1, keepdims=True)
        return (t - mu) / jnp.sqrt(var + 1e-5) * g + b

    h1 = ln(x, params["ln1_g"], params["ln1_b"])
    qkv = h1 @ params["w_attn"] + params["b_attn"]
    q, k, v = jnp.split(qkv, 3, axis=-1)
    q, k, v = (t.reshape(B, S, n_head, Hd).transpose(0, 2, 1, 3) for t in (q, k, v))
    s = jnp.einsum("bhqd,bhkd->bhqk", q, k) / math.sqrt(Hd)
    s = jnp.where(mask[:, :, :, :S] != 0.0, s, -1e30)
    p = jax.nn.softmax(s, axis=-1)
    y = jnp.einsum("bhqk,bhkd->bhqd", p, v).transpose(0, 2, 1, 3).reshape(B, S, D)
    h = x + y @ params["w_proj"] + params["b_proj"]
    h2 = ln(h, params["ln2_g"], params["ln2_b"])
    ff = jax.nn.gelu(h2 @ params["w_fc"] + params["b_fc"], approximate=True)
    return h + ff @ params["w_proj2"] + params["b_proj2"]


# ----------------------------------- main ----------------------------------- #

if __name__ == "__main__":
    B, S = 2, 8
    dim, n_head = 32, 4
    inter = 4 * dim

    key = jax.random.PRNGKey(0)
    ks = jax.random.split(key, 13)
    x = jax.random.normal(ks[0], (B, S, dim), dtype=jnp.float32)

    def init_w(k, shape):
        return jax.random.normal(k, shape, dtype=jnp.float32) * 0.02

    # Weights stored pre-transposed as (in, out) so kernels compute x @ W + b.
    params = {
        "ln1_g": 1.0 + 0.1 * jax.random.normal(ks[1], (dim,), dtype=jnp.float32),
        "ln1_b": 0.1 * jax.random.normal(ks[2], (dim,), dtype=jnp.float32),
        "w_attn": init_w(ks[3], (dim, 3 * dim)),
        "b_attn": init_w(ks[4], (3 * dim,)),
        "w_proj": init_w(ks[5], (dim, dim)),
        "b_proj": init_w(ks[6], (dim,)),
        "ln2_g": 1.0 + 0.1 * jax.random.normal(ks[7], (dim,), dtype=jnp.float32),
        "ln2_b": 0.1 * jax.random.normal(ks[8], (dim,), dtype=jnp.float32),
        "w_fc": init_w(ks[9], (dim, inter)),
        "b_fc": init_w(ks[10], (inter,)),
        "w_proj2": init_w(ks[11], (inter, dim)),
        "b_proj2": init_w(ks[12], (dim,)),
    }

    # Causal mask (True/1.0 = attend), broadcast to (B, 1, S, S).
    causal = jnp.tril(jnp.ones((S, S), dtype=jnp.float32))
    mask = jnp.broadcast_to(causal[None, None, :, :], (B, 1, S, S))

    fwd = jax.jit(functools.partial(transformer_block_forward, n_head=n_head))
    out = fwd(x, mask, params)
    out = jax.block_until_ready(out)

    ref = transformer_block_reference(x, mask, params, n_head)
    np.testing.assert_allclose(np.asarray(out), np.asarray(ref), atol=2e-3, rtol=2e-3)

    print("KERNEL_OK")
</pallas_src>

<mosaic_0001>
module attributes {stable_mosaic.version = 11 : i64} {
  func.func @kernel(%arg0: i32, %arg1: i32, %arg2: memref<16x32xf32, #tpu.memory_space<vmem>>, %arg3: memref<1x32xf32, #tpu.memory_space<vmem>>, %arg4: memref<1x32xf32, #tpu.memory_space<vmem>>, %arg5: memref<32x96xf32, #tpu.memory_space<vmem>>, %arg6: memref<1x96xf32, #tpu.memory_space<vmem>>, %arg7: memref<16x96xf32, #tpu.memory_space<vmem>>) attributes {dimension_semantics = [#tpu.dimension_semantics<parallel>, #tpu.dimension_semantics<parallel>], iteration_bounds = array<i64: 1, 1>, scalar_prefetch = 0 : i64, scratch_operands = 0 : i64, tpu.core_type = #tpu.core_type<tc>, window_params = [{transform_indices = @transform_0, window_bounds = array<i64: 16, 32>}, {pipeline_mode = #tpu.pipeline_mode<synchronous>, transform_indices = @transform_1, window_bounds = array<i64: 1, 32>}, {pipeline_mode = #tpu.pipeline_mode<synchronous>, transform_indices = @transform_2, window_bounds = array<i64: 1, 32>}, {transform_indices = @transform_3, window_bounds = array<i64: 32, 96>}, {transform_indices = @transform_4, window_bounds = array<i64: 1, 96>}, {transform_indices = @transform_5, window_bounds = array<i64: 16, 96>}]} {
    %c0 = arith.constant 0 : index
    %c0_0 = arith.constant 0 : index
    %0 = vector.load %arg2[%c0, %c0_0] : memref<16x32xf32, #tpu.memory_space<vmem>>, vector<16x32xf32>
    %cst = arith.constant dense<0.000000e+00> : vector<16xf32>
    %1 = vector.multi_reduction <add>, %0, %cst [1] : vector<16x32xf32> to vector<16xf32>
    %2 = vector.shape_cast %1 : vector<16xf32> to vector<16x1xf32>
    %cst_1 = arith.constant 3.200000e+01 : f32
    %3 = vector.broadcast %cst_1 : f32 to vector<16x1xf32>
    %4 = arith.divf %2, %3 : vector<16x1xf32>
    %5 = vector.broadcast %4 : vector<16x1xf32> to vector<16x32xf32>
    %6 = arith.subf %0, %5 : vector<16x32xf32>
    %7 = arith.mulf %6, %6 : vector<16x32xf32>
    %cst_2 = arith.constant dense<0.000000e+00> : vector<16xf32>
    %8 = vector.multi_reduction <add>, %7, %cst_2 [1] : vector<16x32xf32> to vector<16xf32>
    %9 = vector.shape_cast %8 : vector<16xf32> to vector<16x1xf32>
    %cst_3 = arith.constant 3.200000e+01 : f32
    %10 = vector.broadcast %cst_3 : f32 to vector<16x1xf32>
    %11 = arith.divf %9, %10 : vector<16x1xf32>
    %cst_4 = arith.constant 9.99999974E-6 : f32
    %12 = vector.broadcast %cst_4 : f32 to vector<16x1xf32>
    %13 = arith.addf %11, %12 : vector<16x1xf32>
    %14 = math.rsqrt %13 : vector<16x1xf32>
    %15 = vector.broadcast %14 : vector<16x1xf32> to vector<16x32xf32>
    %16 = arith.mulf %6, %15 : vector<16x32xf32>
    %c0_5 = arith.constant 0 : index
    %c0_6 = arith.constant 0 : index
    %17 = vector.load %arg3[%c0_5, %c0_6] : memref<1x32xf32, #tpu.memory_space<vmem>>, vector<1x32xf32>
    %18 = vector.broadcast %17 : vector<1x32xf32> to vector<16x32xf32>
    %19 = arith.mulf %16, %18 : vector<16x32xf32>
    %c0_7 = arith.constant 0 : index
    %c0_8 = arith.constant 0 : index
    %20 = vector.load %arg4[%c0_7, %c0_8] : memref<1x32xf32, #tpu.memory_space<vmem>>, vector<1x32xf32>
    %21 = vector.broadcast %20 : vector<1x32xf32> to vector<16x32xf32>
    %22 = arith.addf %19, %21 : vector<16x32xf32>
    %c0_9 = arith.constant 0 : index
    %c0_10 = arith.constant 0 : index
    %23 = vector.load %arg5[%c0_9, %c0_10] : memref<32x96xf32, #tpu.memory_space<vmem>>, vector<32x96xf32>
    %cst_11 = arith.constant dense<0.000000e+00> : vector<16x96xf32>
    %24 = tpu.matmul %22, %23, %cst_11 {dimension_numbers = #tpu.dot_dimension_numbers<[1], [0], [0], [1], [0, 0, 1, 1], [], []>} : vector<16x32xf32>, vector<32x96xf32>, vector<16x96xf32> -> vector<16x96xf32>
    %c0_12 = arith.constant 0 : index
    %c0_13 = arith.constant 0 : index
    %25 = vector.load %arg6[%c0_12, %c0_13] : memref<1x96xf32, #tpu.memory_space<vmem>>, vector<1x96xf32>
    %26 = vector.broadcast %25 : vector<1x96xf32> to vector<16x96xf32>
    %27 = arith.addf %24, %26 : vector<16x96xf32>
    %c0_14 = arith.constant 0 : index
    %c0_15 = arith.constant 0 : index
    %28 = vector.load %arg7[%c0_14, %c0_15] : memref<16x96xf32, #tpu.memory_space<vmem>>, vector<16x96xf32>
    tpu.vector_store %arg7[%c0_14, %c0_15], %27 {strides = array<i32>} : memref<16x96xf32, #tpu.memory_space<vmem>>, vector<16x96xf32>,
    return
  }
  func.func @transform_0(%arg0: i32, %arg1: i32) -> (i32, i32) {
    %c0_i32 = arith.constant 0 : i32
    %c0_i32_0 = arith.constant 0 : i32
    return %arg0, %c0_i32 : i32, i32
  }
  func.func @transform_1(%arg0: i32, %arg1: i32) -> (i32, i32) {
    %c0_i32 = arith.constant 0 : i32
    %c0_i32_0 = arith.constant 0 : i32
    %c0_i32_1 = arith.constant 0 : i32
    return %c0_i32, %c0_i32_0 : i32, i32
  }
  func.func @transform_2(%arg0: i32, %arg1: i32) -> (i32, i32) {
    %c0_i32 = arith.constant 0 : i32
    %c0_i32_0 = arith.constant 0 : i32
    %c0_i32_1 = arith.constant 0 : i32
    return %c0_i32, %c0_i32_0 : i32, i32
  }
  func.func @transform_3(%arg0: i32, %arg1: i32) -> (i32, i32) {
    %c0_i32 = arith.constant 0 : i32
    %c0_i32_0 = arith.constant 0 : i32
    return %c0_i32, %arg1 : i32, i32
  }
  func.func @transform_4(%arg0: i32, %arg1: i32) -> (i32, i32) {
    %c0_i32 = arith.constant 0 : i32
    %c0_i32_0 = arith.constant 0 : i32
    return %c0_i32, %arg1 : i32, i32
  }
  func.func @transform_5(%arg0: i32, %arg1: i32) -> (i32, i32) {
    %c0_i32 = arith.constant 0 : i32
    return %arg0, %arg1 : i32, i32
  }
}

module attributes {stable_mosaic.version = 11 : i64} {
  func.func @kernel(%arg0: i32, %arg1: i32, %arg2: i32, %arg3: i32, %arg4: memref<1x1x8x8xf32, #tpu.memory_space<vmem>>, %arg5: memref<1x1x8x8xf32, #tpu.memory_space<vmem>>, %arg6: memref<1x1x8x8xf32, #tpu.memory_space<vmem>>, %arg7: memref<1x1x8x8xf32, #tpu.memory_space<vmem>>, %arg8: memref<1x1x8x8xf32, #tpu.memory_space<vmem>>, %arg9: memref<8x1xf32, #tpu.memory_space<vmem>>, %arg10: memref<8x1xf32, #tpu.memory_space<vmem>>, %arg11: memref<8x8xf32, #tpu.memory_space<vmem>>) attributes {dimension_semantics = [#tpu.dimension_semantics<parallel>, #tpu.dimension_semantics<parallel>, #tpu.dimension_semantics<parallel>, #tpu.dimension_semantics<arbitrary>], iteration_bounds = array<i64: 2, 4, 1, 1>, scalar_prefetch = 0 : i64, scratch_operands = 3 : i64, tpu.core_type = #tpu.core_type<tc>, window_params = [{transform_indices = @transform_0, window_bounds = array<i64: 1, 1, 8, 8>}, {transform_indices = @transform_1, window_bounds = array<i64: 1, 1, 8, 8>}, {transform_indices = @transform_2, window_bounds = array<i64: 1, 1, 8, 8>}, {transform_indices = @transform_3, window_bounds = array<i64: 1, 1, 8, 8>}, {transform_indices = @transform_4, window_bounds = array<i64: 1, 1, 8, 8>}]} {
    %c0_i32 = arith.constant 0 : i32
    %0 = arith.cmpi eq, %arg3, %c0_i32 : i32
    %1 = arith.extui %0 : i1 to i32
    %c0_i32_0 = arith.constant 0 : i32
    %2 = arith.cmpi ne, %1, %c0_i32_0 : i32
    scf.if %2 {
      %cst_36 = arith.constant 0xFF800000 : f32
      %43 = vector.broadcast %cst_36 : f32 to vector<8x1xf32>
      %c0_37 = arith.constant 0 : index
      %c0_38 = arith.constant 0 : index
      %44 = vector.load %arg9[%c0_37, %c0_38] : memref<8x1xf32, #tpu.memory_space<vmem>>, vector<8x1xf32>
      tpu.vector_store %arg9[%c0_37, %c0_38], %43 {strides = array<i32>} : memref<8x1xf32, #tpu.memory_space<vmem>>, vector<8x1xf32>,
      %cst_39 = arith.constant 0.000000e+00 : f32
      %45 = vector.broadcast %cst_39 : f32 to vector<8x1xf32>
      %c0_40 = arith.constant 0 : index
      %c0_41 = arith.constant 0 : index
      %46 = vector.load %arg10[%c0_40, %c0_41] : memref<8x1xf32, #tpu.memory_space<vmem>>, vector<8x1xf32>
      tpu.vector_store %arg10[%c0_40, %c0_41], %45 {strides = array<i32>} : memref<8x1xf32, #tpu.memory_space<vmem>>, vector<8x1xf32>,
      %cst_42 = arith.constant 0.000000e+00 : f32
      %47 = vector.broadcast %cst_42 : f32 to vector<8x8xf32>
      %c0_43 = arith.constant 0 : index
      %c0_44 = arith.constant 0 : index
      %48 = vector.load %arg11[%c0_43, %c0_44] : memref<8x8xf32, #tpu.memory_space<vmem>>, vector<8x8xf32>
      tpu.vector_store %arg11[%c0_43, %c0_44], %47 {strides = array<i32>} : memref<8x8xf32, #tpu.memory_space<vmem>>, vector<8x8xf32>,
    } else {
    }
    %c0 = arith.constant 0 : index
    %c0_1 = arith.constant 0 : index
    %c0_2 = arith.constant 0 : index
    %c0_3 = arith.constant 0 : index
    %3 = vector.load %arg4[%c0, %c0_1, %c0_2, %c0_3] : memref<1x1x8x8xf32, #tpu.memory_space<vmem>>, vector<1x1x8x8xf32>
    %4 = vector.shape_cast %3 : vector<1x1x8x8xf32> to vector<8x8xf32>
    %cst = arith.constant 0.353553385 : f32
    %5 = vector.broadcast %cst : f32 to vector<8x8xf32>
    %6 = arith.mulf %4, %5 : vector<8x8xf32>
    %c0_4 = arith.constant 0 : index
    %c0_5 = arith.constant 0 : index
    %c0_6 = arith.constant 0 : index
    %c0_7 = arith.constant 0 : index
    %7 = vector.load %arg5[%c0_4, %c0_5, %c0_6, %c0_7] : memref<1x1x8x8xf32, #tpu.memory_space<vmem>>, vector<1x1x8x8xf32>
    %8 = vector.shape_cast %7 : vector<1x1x8x8xf32> to vector<8x8xf32>
    %cst_8 = arith.constant dense<0.000000e+00> : vector<8x8xf32>
    %9 = tpu.matmul %6, %8, %cst_8 {dimension_numbers = #tpu.dot_dimension_numbers<[1], [1], [0], [0], [0, 0, 1, 0], [], []>} : vector<8x8xf32>, vector<8x8xf32>, vector<8x8xf32> -> vector<8x8xf32>
    %c0_9 = arith.constant 0 : index
    %c0_10 = arith.constant 0 : index
    %c0_11 = arith.constant 0 : index
    %c0_12 = arith.constant 0 : index
    %10 = vector.load %arg7[%c0_9, %c0_10, %c0_11, %c0_12] : memref<1x1x8x8xf32, #tpu.memory_space<vmem>>, vector<1x1x8x8xf32>
    %11 = vector.shape_cast %10 : vector<1x1x8x8xf32> to vector<8x8xf32>
    %cst_13 = arith.constant 0.000000e+00 : f32
    %12 = vector.broadcast %cst_13 : f32 to vector<8x8xf32>
    %13 = arith.cmpf one, %11, %12 : vector<8x8xf32>
    %cst_14 = arith.constant -1.000000e+30 : f32
    %14 = vector.broadcast %cst_14 : f32 to vector<8x8xf32>
    %15 = arith.select %13, %9, %14 : vector<8x8xi1>, vector<8x8xf32>
    %c0_15 = arith.constant 0 : index
    %c0_16 = arith.constant 0 : index
    %16 = vector.load %arg9[%c0_15, %c0_16] : memref<8x1xf32, #tpu.memory_space<vmem>>, vector<8x1xf32>
    %cst_17 = arith.constant dense<0xFF800000> : vector<8xf32>
    %17 = vector.multi_reduction <maximumf>, %15, %cst_17 [1] : vector<8x8xf32> to vector<8xf32>
    %18 = vector.shape_cast %17 : vector<8xf32> to vector<8x1xf32>
    %19 = arith.maximumf %16, %18 : vector<8x1xf32>
    %20 = arith.subf %16, %19 : vector<8x1xf32>
    %21 = math.exp %20 : vector<8x1xf32>
    %22 = vector.broadcast %19 : vector<8x1xf32> to vector<8x8xf32>
    %23 = arith.subf %15, %22 : vector<8x8xf32>
    %24 = math.exp %23 : vector<8x8xf32>
    %c0_18 = arith.constant 0 : index
    %c0_19 = arith.constant 0 : index
    %25 = vector.load %arg10[%c0_18, %c0_19] : memref<8x1xf32, #tpu.memory_space<vmem>>, vector<8x1xf32>
    %26 = arith.mulf %21, %25 : vector<8x1xf32>
    %cst_20 = arith.constant dense<0.000000e+00> : vector<8xf32>
    %27 = vector.multi_reduction <add>, %24, %cst_20 [1] : vector<8x8xf32> to vector<8xf32>
    %28 = vector.shape_cast %27 : vector<8xf32> to vector<8x1xf32>
    %29 = arith.addf %26, %28 : vector<8x1xf32>
    %c0_21 = arith.constant 0 : index
    %c0_22 = arith.constant 0 : index
    %30 = vector.load %arg10[%c0_21, %c0_22] : memref<8x1xf32, #tpu.memory_space<vmem>>, vector<8x1xf32>
    tpu.vector_store %arg10[%c0_21, %c0_22], %29 {strides = array<i32>} : memref<8x1xf32, #tpu.memory_space<vmem>>, vector<8x1xf32>,
    %c0_23 = arith.constant 0 : index
    %c0_24 = arith.constant 0 : index
    %31 = vector.load %arg11[%c0_23, %c0_24] : memref<8x8xf32, #tpu.memory_space<vmem>>, vector<8x8xf32>
    %32 = vector.broadcast %21 : vector<8x1xf32> to vector<8x8xf32>
    %33 = arith.mulf %32, %31 : vector<8x8xf32>
    %c0_25 = arith.constant 0 : index
    %c0_26 = arith.constant 0 : index
    %c0_27 = arith.constant 0 : index
    %c0_28 = arith.constant 0 : index
    %34 = vector.load %arg6[%c0_25, %c0_26, %c0_27, %c0_28] : memref<1x1x8x8xf32, #tpu.memory_space<vmem>>, vector<1x1x8x8xf32>
    %35 = vector.shape_cast %34 : vector<1x1x8x8xf32> to vector<8x8xf32>
    %cst_29 = arith.constant dense<0.000000e+00> : vector<8x8xf32>
    %36 = tpu.matmul %24, %35, %cst_29 {dimension_numbers = #tpu.dot_dimension_numbers<[1], [0], [0], [1], [0, 0, 1, 1], [], []>} : vector<8x8xf32>, vector<8x8xf32>, vector<8x8xf32> -> vector<8x8xf32>
    %37 = arith.addf %33, %36 : vector<8x8xf32>
    %c0_30 = arith.constant 0 : index
    %c0_31 = arith.constant 0 : index
    %38 = vector.load %arg11[%c0_30, %c0_31] : memref<8x8xf32, #tpu.memory_space<vmem>>, vector<8x8xf32>
    tpu.vector_store %arg11[%c0_30, %c0_31], %37 {strides = array<i32>} : memref<8x8xf32, #tpu.memory_space<vmem>>, vector<8x8xf32>,
    %c0_32 = arith.constant 0 : index
    %c0_33 = arith.constant 0 : index
    %39 = vector.load %arg9[%c0_32, %c0_33] : memref<8x1xf32, #tpu.memory_space<vmem>>, vector<8x1xf32>
    tpu.vector_store %arg9[%c0_32, %c0_33], %19 {strides = array<i32>} : memref<8x1xf32, #tpu.memory_space<vmem>>, vector<8x1xf32>,
    %c0_i32_34 = arith.constant 0 : i32
    %40 = arith.cmpi eq, %arg3, %c0_i32_34 : i32
    %41 = arith.extui %40 : i1 to i32
    %c0_i32_35 = arith.constant 0 : i32
    %42 = arith.cmpi ne, %41, %c0_i32_35 : i32
    scf.if %42 {
      %c0_36 = arith.constant 0 : index
      %c0_37 = arith.constant 0 : index
      %43 = vector.load %arg10[%c0_36, %c0_37] : memref<8x1xf32, #tpu.memory_space<vmem>>, vector<8x1xf32>
      %44 = tpu.reciprocal %43 {approx = true} : vector<8x1xf32> -> vector<8x1xf32>
      %c0_38 = arith.constant 0 : index
      %c0_39 = arith.constant 0 : index
      %45 = vector.load %arg11[%c0_38, %c0_39] : memref<8x8xf32, #tpu.memory_space<vmem>>, vector<8x8xf32>
      %46 = vector.broadcast %44 : vector<8x1xf32> to vector<8x8xf32>
      %47 = arith.mulf %45, %46 : vector<8x8xf32>
      %c0_40 = arith.constant 0 : index
      %c0_41 = arith.constant 0 : index
      %c0_42 = arith.constant 0 : index
      %c0_43 = arith.constant 0 : index
      %48 = vector.load %arg8[%c0_40, %c0_41, %c0_42, %c0_43] : memref<1x1x8x8xf32, #tpu.memory_space<vmem>>, vector<1x1x8x8xf32>
      %49 = vector.shape_cast %48 : vector<1x1x8x8xf32> to vector<8x8xf32>
      %50 = vector.shape_cast %47 : vector<8x8xf32> to vector<1x1x8x8xf32>
      tpu.vector_store %arg8[%c0_40, %c0_41, %c0_42, %c0_43], %50 {strides = array<i32>} : memref<1x1x8x8xf32, #tpu.memory_space<vmem>>, vector<1x1x8x8xf32>,
    } else {
    }
    return
  }
  func.func @transform_0(%arg0: i32, %arg1: i32, %arg2: i32, %arg3: i32) -> (i32, i32, i32, i32) {
    %c0_i32 = arith.constant 0 : i32
    %c0_i32_0 = arith.constant 0 : i32
    return %arg0, %arg1, %arg2, %c0_i32 : i32, i32, i32, i32
  }
  func.func @transform_1(%arg0: i32, %arg1: i32, %arg2: i32, %arg3: i32) -> (i32, i32, i32, i32) {
    %c0_i32 = arith.constant 0 : i32
    %c0_i32_0 = arith.constant 0 : i32
    return %arg0, %arg1, %arg3, %c0_i32 : i32, i32, i32, i32
  }
  func.func @transform_2(%arg0: i32, %arg1: i32, %arg2: i32, %arg3: i32) -> (i32, i32, i32, i32) {
    %c0_i32 = arith.constant 0 : i32
    %c0_i32_0 = arith.constant 0 : i32
    return %arg0, %arg1, %arg3, %c0_i32 : i32, i32, i32, i32
  }
  func.func @transform_3(%arg0: i32, %arg1: i32, %arg2: i32, %arg3: i32) -> (i32, i32, i32, i32) {
    %c0_i32 = arith.constant 0 : i32
    %c0_i32_0 = arith.constant 0 : i32
    return %arg0, %c0_i32, %arg2, %arg3 : i32, i32, i32, i32
  }
  func.func @transform_4(%arg0: i32, %arg1: i32, %arg2: i32, %arg3: i32) -> (i32, i32, i32, i32) {
    %c0_i32 = arith.constant 0 : i32
    %c0_i32_0 = arith.constant 0 : i32
    return %arg0, %arg1, %arg2, %c0_i32 : i32, i32, i32, i32
  }
}

module attributes {stable_mosaic.version = 11 : i64} {
  func.func @kernel(%arg0: i32, %arg1: i32, %arg2: i32, %arg3: memref<16x32xf32, #tpu.memory_space<vmem>>, %arg4: memref<32x32xf32, #tpu.memory_space<vmem>>, %arg5: memref<1x32xf32, #tpu.memory_space<vmem>>, %arg6: memref<16x32xf32, #tpu.memory_space<vmem>>, %arg7: memref<16x32xf32, #tpu.memory_space<vmem>>, %arg8: memref<16x32xf32, #tpu.memory_space<vmem>>) attributes {dimension_semantics = [#tpu.dimension_semantics<parallel>, #tpu.dimension_semantics<parallel>, #tpu.dimension_semantics<arbitrary>], iteration_bounds = array<i64: 1, 1, 1>, scalar_prefetch = 0 : i64, scratch_operands = 1 : i64, tpu.core_type = #tpu.core_type<tc>, window_params = [{transform_indices = @transform_0, window_bounds = array<i64: 16, 32>}, {transform_indices = @transform_1, window_bounds = array<i64: 32, 32>}, {transform_indices = @transform_2, window_bounds = array<i64: 1, 32>}, {transform_indices = @transform_3, window_bounds = array<i64: 16, 32>}, {transform_indices = @transform_4, window_bounds = array<i64: 16, 32>}]} {
    %c0_i32 = arith.constant 0 : i32
    %0 = arith.cmpi eq, %arg2, %c0_i32 : i32
    %1 = arith.extui %0 : i1 to i32
    %c0_i32_0 = arith.constant 0 : i32
    %2 = arith.cmpi ne, %1, %c0_i32_0 : i32
    scf.if %2 {
      %cst_10 = arith.constant 0.000000e+00 : f32
      %12 = vector.broadcast %cst_10 : f32 to vector<16x32xf32>
      %c0_11 = arith.constant 0 : index
      %c0_12 = arith.constant 0 : index
      %13 = vector.load %arg8[%c0_11, %c0_12] : memref<16x32xf32, #tpu.memory_space<vmem>>, vector<16x32xf32>
      tpu.vector_store %arg8[%c0_11, %c0_12], %12 {strides = array<i32>} : memref<16x32xf32, #tpu.memory_space<vmem>>, vector<16x32xf32>,
    } else {
    }
    %c0 = arith.constant 0 : index
    %c0_1 = arith.constant 0 : index
    %3 = vector.load %arg8[%c0, %c0_1] : memref<16x32xf32, #tpu.memory_space<vmem>>, vector<16x32xf32>
    %c0_2 = arith.constant 0 : index
    %c0_3 = arith.constant 0 : index
    %4 = vector.load %arg3[%c0_2, %c0_3] : memref<16x32xf32, #tpu.memory_space<vmem>>, vector<16x32xf32>
    %c0_4 = arith.constant 0 : index
    %c0_5 = arith.constant 0 : index
    %5 = vector.load %arg4[%c0_4, %c0_5] : memref<32x32xf32, #tpu.memory_space<vmem>>, vector<32x32xf32>
    %cst = arith.constant dense<0.000000e+00> : vector<16x32xf32>
    %6 = tpu.matmul %4, %5, %cst {dimension_numbers = #tpu.dot_dimension_numbers<[1], [0], [0], [1], [0, 0, 1, 1], [], []>} : vector<16x32xf32>, vector<32x32xf32>, vector<16x32xf32> -> vector<16x32xf32>
    %7 = arith.addf %3, %6 : vector<16x32xf32>
    %c0_6 = arith.constant 0 : index
    %c0_7 = arith.constant 0 : index
    %8 = vector.load %arg8[%c0_6, %c0_7] : memref<16x32xf32, #tpu.memory_space<vmem>>, vector<16x32xf32>
    tpu.vector_store %arg8[%c0_6, %c0_7], %7 {strides = array<i32>} : memref<16x32xf32, #tpu.memory_space<vmem>>, vector<16x32xf32>,
    %c0_i32_8 = arith.constant 0 : i32
    %9 = arith.cmpi eq, %arg2, %c0_i32_8 : i32
    %10 = arith.extui %9 : i1 to i32
    %c0_i32_9 = arith.constant 0 : i32
    %11 = arith.cmpi ne, %10, %c0_i32_9 : i32
    scf.if %11 {
      %c0_10 = arith.constant 0 : index
      %c0_11 = arith.constant 0 : index
      %12 = vector.load %arg8[%c0_10, %c0_11] : memref<16x32xf32, #tpu.memory_space<vmem>>, vector<16x32xf32>
      %c0_12 = arith.constant 0 : index
      %c0_13 = arith.constant 0 : index
      %13 = vector.load %arg5[%c0_12, %c0_13] : memref<1x32xf32, #tpu.memory_space<vmem>>, vector<1x32xf32>
      %14 = vector.broadcast %13 : vector<1x32xf32> to vector<16x32xf32>
      %15 = arith.addf %12, %14 : vector<16x32xf32>
      %c0_14 = arith.constant 0 : index
      %c0_15 = arith.constant 0 : index
      %16 = vector.load %arg6[%c0_14, %c0_15] : memref<16x32xf32, #tpu.memory_space<vmem>>, vector<16x32xf32>
      %17 = arith.addf %15, %16 : vector<16x32xf32>
      %c0_16 = arith.constant 0 : index
      %c0_17 = arith.constant 0 : index
      %18 = vector.load %arg7[%c0_16, %c0_17] : memref<16x32xf32, #tpu.memory_space<vmem>>, vector<16x32xf32>
      tpu.vector_store %arg7[%c0_16, %c0_17], %17 {strides = array<i32>} : memref<16x32xf32, #tpu.memory_space<vmem>>, vector<16x32xf32>,
    } else {
    }
    return
  }
  func.func @transform_0(%arg0: i32, %arg1: i32, %arg2: i32) -> (i32, i32) {
    %c0_i32 = arith.constant 0 : i32
    return %arg0, %arg2 : i32, i32
  }
  func.func @transform_1(%arg0: i32, %arg1: i32, %arg2: i32) -> (i32, i32) {
    %c0_i32 = arith.constant 0 : i32
    return %arg2, %arg1 : i32, i32
  }
  func.func @transform_2(%arg0: i32, %arg1: i32, %arg2: i32) -> (i32, i32) {
    %c0_i32 = arith.constant 0 : i32
    %c0_i32_0 = arith.constant 0 : i32
    return %c0_i32, %arg1 : i32, i32
  }
  func.func @transform_3(%arg0: i32, %arg1: i32, %arg2: i32) -> (i32, i32) {
    %c0_i32 = arith.constant 0 : i32
    return %arg0, %arg1 : i32, i32
  }
  func.func @transform_4(%arg0: i32, %arg1: i32, %arg2: i32) -> (i32, i32) {
    %c0_i32 = arith.constant 0 : i32
    return %arg0, %arg1 : i32, i32
  }
}

module attributes {stable_mosaic.version = 11 : i64} {
  func.func @kernel(%arg0: i32, %arg1: i32, %arg2: memref<16x32xf32, #tpu.memory_space<vmem>>, %arg3: memref<1x32xf32, #tpu.memory_space<vmem>>, %arg4: memref<1x32xf32, #tpu.memory_space<vmem>>, %arg5: memref<32x128xf32, #tpu.memory_space<vmem>>, %arg6: memref<1x128xf32, #tpu.memory_space<vmem>>, %arg7: memref<16x128xf32, #tpu.memory_space<vmem>>) attributes {dimension_semantics = [#tpu.dimension_semantics<parallel>, #tpu.dimension_semantics<parallel>], iteration_bounds = array<i64: 1, 1>, scalar_prefetch = 0 : i64, scratch_operands = 0 : i64, tpu.core_type = #tpu.core_type<tc>, window_params = [{transform_indices = @transform_0, window_bounds = array<i64: 16, 32>}, {pipeline_mode = #tpu.pipeline_mode<synchronous>, transform_indices = @transform_1, window_bounds = array<i64: 1, 32>}, {pipeline_mode = #tpu.pipeline_mode<synchronous>, transform_indices = @transform_2, window_bounds = array<i64: 1, 32>}, {transform_indices = @transform_3, window_bounds = array<i64: 32, 128>}, {transform_indices = @transform_4, window_bounds = array<i64: 1, 128>}, {transform_indices = @transform_5, window_bounds = array<i64: 16, 128>}]} {
    %c0 = arith.constant 0 : index
    %c0_0 = arith.constant 0 : index
    %0 = vector.load %arg2[%c0, %c0_0] : memref<16x32xf32, #tpu.memory_space<vmem>>, vector<16x32xf32>
    %cst = arith.constant dense<0.000000e+00> : vector<16xf32>
    %1 = vector.multi_reduction <add>, %0, %cst [1] : vector<16x32xf32> to vector<16xf32>
    %2 = vector.shape_cast %1 : vector<16xf32> to vector<16x1xf32>
    %cst_1 = arith.constant 3.200000e+01 : f32
    %3 = vector.broadcast %cst_1 : f32 to vector<16x1xf32>
    %4 = arith.divf %2, %3 : vector<16x1xf32>
    %5 = vector.broadcast %4 : vector<16x1xf32> to vector<16x32xf32>
    %6 = arith.subf %0, %5 : vector<16x32xf32>
    %7 = arith.mulf %6, %6 : vector<16x32xf32>
    %cst_2 = arith.constant dense<0.000000e+00> : vector<16xf32>
    %8 = vector.multi_reduction <add>, %7, %cst_2 [1] : vector<16x32xf32> to vector<16xf32>
    %9 = vector.shape_cast %8 : vector<16xf32> to vector<16x1xf32>
    %cst_3 = arith.constant 3.200000e+01 : f32
    %10 = vector.broadcast %cst_3 : f32 to vector<16x1xf32>
    %11 = arith.divf %9, %10 : vector<16x1xf32>
    %cst_4 = arith.constant 9.99999974E-6 : f32
    %12 = vector.broadcast %cst_4 : f32 to vector<16x1xf32>
    %13 = arith.addf %11, %12 : vector<16x1xf32>
    %14 = math.rsqrt %13 : vector<16x1xf32>
    %15 = vector.broadcast %14 : vector<16x1xf32> to vector<16x32xf32>
    %16 = arith.mulf %6, %15 : vector<16x32xf32>
    %c0_5 = arith.constant 0 : index
    %c0_6 = arith.constant 0 : index
    %17 = vector.load %arg3[%c0_5, %c0_6] : memref<1x32xf32, #tpu.memory_space<vmem>>, vector<1x32xf32>
    %18 = vector.broadcast %17 : vector<1x32xf32> to vector<16x32xf32>
    %19 = arith.mulf %16, %18 : vector<16x32xf32>
    %c0_7 = arith.constant 0 : index
    %c0_8 = arith.constant 0 : index
    %20 = vector.load %arg4[%c0_7, %c0_8] : memref<1x32xf32, #tpu.memory_space<vmem>>, vector<1x32xf32>
    %21 = vector.broadcast %20 : vector<1x32xf32> to vector<16x32xf32>
    %22 = arith.addf %19, %21 : vector<16x32xf32>
    %c0_9 = arith.constant 0 : index
    %c0_10 = arith.constant 0 : index
    %23 = vector.load %arg5[%c0_9, %c0_10] : memref<32x128xf32, #tpu.memory_space<vmem>>, vector<32x128xf32>
    %cst_11 = arith.constant dense<0.000000e+00> : vector<16x128xf32>
    %24 = tpu.matmul %22, %23, %cst_11 {dimension_numbers = #tpu.dot_dimension_numbers<[1], [0], [0], [1], [0, 0, 1, 1], [], []>} : vector<16x32xf32>, vector<32x128xf32>, vector<16x128xf32> -> vector<16x128xf32>
    %c0_12 = arith.constant 0 : index
    %c0_13 = arith.constant 0 : index
    %25 = vector.load %arg6[%c0_12, %c0_13] : memref<1x128xf32, #tpu.memory_space<vmem>>, vector<1x128xf32>
    %26 = vector.broadcast %25 : vector<1x128xf32> to vector<16x128xf32>
    %27 = arith.addf %24, %26 : vector<16x128xf32>
    %28 = arith.mulf %27, %27 : vector<16x128xf32>
    %29 = arith.mulf %27, %28 : vector<16x128xf32>
    %cst_14 = arith.constant 4.471500e-02 : f32
    %30 = vector.broadcast %cst_14 : f32 to vector<16x128xf32>
    %31 = arith.mulf %30, %29 : vector<16x128xf32>
    %32 = arith.addf %27, %31 : vector<16x128xf32>
    %cst_15 = arith.constant 0.797884583 : f32
    %33 = vector.broadcast %cst_15 : f32 to vector<16x128xf32>
    %34 = arith.mulf %33, %32 : vector<16x128xf32>
    %35 = math.tanh %34 : vector<16x128xf32>
    %cst_16 = arith.constant 1.000000e+00 : f32
    %36 = vector.broadcast %cst_16 : f32 to vector<16x128xf32>
    %37 = arith.addf %36, %35 : vector<16x128xf32>
    %cst_17 = arith.constant 5.000000e-01 : f32
    %38 = vector.broadcast %cst_17 : f32 to vector<16x128xf32>
    %39 = arith.mulf %38, %37 : vector<16x128xf32>
    %40 = arith.mulf %27, %39 : vector<16x128xf32>
    %c0_18 = arith.constant 0 : index
    %c0_19 = arith.constant 0 : index
    %41 = vector.load %arg7[%c0_18, %c0_19] : memref<16x128xf32, #tpu.memory_space<vmem>>, vector<16x128xf32>
    tpu.vector_store %arg7[%c0_18, %c0_19], %40 {strides = array<i32>} : memref<16x128xf32, #tpu.memory_space<vmem>>, vector<16x128xf32>,
    return
  }
  func.func @transform_0(%arg0: i32, %arg1: i32) -> (i32, i32) {
    %c0_i32 = arith.constant 0 : i32
    %c0_i32_0 = arith.constant 0 : i32
    return %arg0, %c0_i32 : i32, i32
  }
  func.func @transform_1(%arg0: i32, %arg1: i32) -> (i32, i32) {
    %c0_i32 = arith.constant 0 : i32
    %c0_i32_0 = arith.constant 0 : i32
    %c0_i32_1 = arith.constant 0 : i32
    return %c0_i32, %c0_i32_0 : i32, i32
  }
  func.func @transform_2(%arg0: i32, %arg1: i32) -> (i32, i32) {
    %c0_i32 = arith.constant 0 : i32
    %c0_i32_0 = arith.constant 0 : i32
    %c0_i32_1 = arith.constant 0 : i32
    return %c0_i32, %c0_i32_0 : i32, i32
  }
  func.func @transform_3(%arg0: i32, %arg1: i32) -> (i32, i32) {
    %c0_i32 = arith.constant 0 : i32
    %c0_i32_0 = arith.constant 0 : i32
    return %c0_i32, %arg1 : i32, i32
  }
  func.func @transform_4(%arg0: i32, %arg1: i32) -> (i32, i32) {
    %c0_i32 = arith.constant 0 : i32
    %c0_i32_0 = arith.constant 0 : i32
    return %c0_i32, %arg1 : i32, i32
  }
  func.func @transform_5(%arg0: i32, %arg1: i32) -> (i32, i32) {
    %c0_i32 = arith.constant 0 : i32
    return %arg0, %arg1 : i32, i32
  }
}

module attributes {stable_mosaic.version = 11 : i64} {
  func.func @kernel(%arg0: i32, %arg1: i32, %arg2: i32, %arg3: memref<16x128xf32, #tpu.memory_space<vmem>>, %arg4: memref<128x32xf32, #tpu.memory_space<vmem>>, %arg5: memref<1x32xf32, #tpu.memory_space<vmem>>, %arg6: memref<16x32xf32, #tpu.memory_space<vmem>>, %arg7: memref<16x32xf32, #tpu.memory_space<vmem>>, %arg8: memref<16x32xf32, #tpu.memory_space<vmem>>) attributes {dimension_semantics = [#tpu.dimension_semantics<parallel>, #tpu.dimension_semantics<parallel>, #tpu.dimension_semantics<arbitrary>], iteration_bounds = array<i64: 1, 1, 1>, scalar_prefetch = 0 : i64, scratch_operands = 1 : i64, tpu.core_type = #tpu.core_type<tc>, window_params = [{transform_indices = @transform_0, window_bounds = array<i64: 16, 128>}, {transform_indices = @transform_1, window_bounds = array<i64: 128, 32>}, {transform_indices = @transform_2, window_bounds = array<i64: 1, 32>}, {transform_indices = @transform_3, window_bounds = array<i64: 16, 32>}, {transform_indices = @transform_4, window_bounds = array<i64: 16, 32>}]} {
    %c0_i32 = arith.constant 0 : i32
    %0 = arith.cmpi eq, %arg2, %c0_i32 : i32
    %1 = arith.extui %0 : i1 to i32
    %c0_i32_0 = arith.constant 0 : i32
    %2 = arith.cmpi ne, %1, %c0_i32_0 : i32
    scf.if %2 {
      %cst_10 = arith.constant 0.000000e+00 : f32
      %12 = vector.broadcast %cst_10 : f32 to vector<16x32xf32>
      %c0_11 = arith.constant 0 : index
      %c0_12 = arith.constant 0 : index
      %13 = vector.load %arg8[%c0_11, %c0_12] : memref<16x32xf32, #tpu.memory_space<vmem>>, vector<16x32xf32>
      tpu.vector_store %arg8[%c0_11, %c0_12], %12 {strides = array<i32>} : memref<16x32xf32, #tpu.memory_space<vmem>>, vector<16x32xf32>,
    } else {
    }
    %c0 = arith.constant 0 : index
    %c0_1 = arith.constant 0 : index
    %3 = vector.load %arg8[%c0, %c0_1] : memref<16x32xf32, #tpu.memory_space<vmem>>, vector<16x32xf32>
    %c0_2 = arith.constant 0 : index
    %c0_3 = arith.constant 0 : index
    %4 = vector.load %arg3[%c0_2, %c0_3] : memref<16x128xf32, #tpu.memory_space<vmem>>, vector<16x128xf32>
    %c0_4 = arith.constant 0 : index
    %c0_5 = arith.constant 0 : index
    %5 = vector.load %arg4[%c0_4, %c0_5] : memref<128x32xf32, #tpu.memory_space<vmem>>, vector<128x32xf32>
    %cst = arith.constant dense<0.000000e+00> : vector<16x32xf32>
    %6 = tpu.matmul %4, %5, %cst {dimension_numbers = #tpu.dot_dimension_numbers<[1], [0], [0], [1], [0, 0, 1, 1], [], []>} : vector<16x128xf32>, vector<128x32xf32>, vector<16x32xf32> -> vector<16x32xf32>
    %7 = arith.addf %3, %6 : vector<16x32xf32>
    %c0_6 = arith.constant 0 : index
    %c0_7 = arith.constant 0 : index
    %8 = vector.load %arg8[%c0_6, %c0_7] : memref<16x32xf32, #tpu.memory_space<vmem>>, vector<16x32xf32>
    tpu.vector_store %arg8[%c0_6, %c0_7], %7 {strides = array<i32>} : memref<16x32xf32, #tpu.memory_space<vmem>>, vector<16x32xf32>,
    %c0_i32_8 = arith.constant 0 : i32
    %9 = arith.cmpi eq, %arg2, %c0_i32_8 : i32
    %10 = arith.extui %9 : i1 to i32
    %c0_i32_9 = arith.constant 0 : i32
    %11 = arith.cmpi ne, %10, %c0_i32_9 : i32
    scf.if %11 {
      %c0_10 = arith.constant 0 : index
      %c0_11 = arith.constant 0 : index
      %12 = vector.load %arg8[%c0_10, %c0_11] : memref<16x32xf32, #tpu.memory_space<vmem>>, vector<16x32xf32>
      %c0_12 = arith.constant 0 : index
      %c0_13 = arith.constant 0 : index
      %13 = vector.load %arg5[%c0_12, %c0_13] : memref<1x32xf32, #tpu.memory_space<vmem>>, vector<1x32xf32>
      %14 = vector.broadcast %13 : vector<1x32xf32> to vector<16x32xf32>
      %15 = arith.addf %12, %14 : vector<16x32xf32>
      %c0_14 = arith.constant 0 : index
      %c0_15 = arith.constant 0 : index
      %16 = vector.load %arg6[%c0_14, %c0_15] : memref<16x32xf32, #tpu.memory_space<vmem>>, vector<16x32xf32>
      %17 = arith.addf %15, %16 : vector<16x32xf32>
      %c0_16 = arith.constant 0 : index
      %c0_17 = arith.constant 0 : index
      %18 = vector.load %arg7[%c0_16, %c0_17] : memref<16x32xf32, #tpu.memory_space<vmem>>, vector<16x32xf32>
      tpu.vector_store %arg7[%c0_16, %c0_17], %17 {strides = array<i32>} : memref<16x32xf32, #tpu.memory_space<vmem>>, vector<16x32xf32>,
    } else {
    }
    return
  }
  func.func @transform_0(%arg0: i32, %arg1: i32, %arg2: i32) -> (i32, i32) {
    %c0_i32 = arith.constant 0 : i32
    return %arg0, %arg2 : i32, i32
  }
  func.func @transform_1(%arg0: i32, %arg1: i32, %arg2: i32) -> (i32, i32) {
    %c0_i32 = arith.constant 0 : i32
    return %arg2, %arg1 : i32, i32
  }
  func.func @transform_2(%arg0: i32, %arg1: i32, %arg2: i32) -> (i32, i32) {
    %c0_i32 = arith.constant 0 : i32
    %c0_i32_0 = arith.constant 0 : i32
    return %c0_i32, %arg1 : i32, i32
  }
  func.func @transform_3(%arg0: i32, %arg1: i32, %arg2: i32) -> (i32, i32) {
    %c0_i32 = arith.constant 0 : i32
    return %arg0, %arg1 : i32, i32
  }
  func.func @transform_4(%arg0: i32, %arg1: i32, %arg2: i32) -> (i32, i32) {
    %c0_i32 = arith.constant 0 : i32
    return %arg0, %arg1 : i32, i32
  }
}

</mosaic_0001>

<llo_original>
// kernel: transformer_block_forward.5
$region0: #{transformer_block_forward.5}
  #allocation0 [shape = 'u32[]', space=smem, size = 0x4, offset = 0x4, fixed_abs, tag = 'smem constant byte address 0x4 - core index']
  #allocation1 [shape = 'u32[144,128]{1,0:T(1,128)}', space=vmem, size = 0x12000, scoped, tag = 'internal scratch']
  %s0 = inlined_call_operand.hbm [shape: f32[16,32], index: 0, kind: input, shape index: {}]
  %s1 = inlined_call_operand.hbm [shape: f32[1,32], index: 1, kind: input, shape index: {}]
  %s2 = inlined_call_operand.hbm [shape: f32[1,32], index: 2, kind: input, shape index: {}]
  %s3 = inlined_call_operand.hbm [shape: f32[32,96], index: 3, kind: input, shape index: {}]
  %s4 = inlined_call_operand.hbm [shape: f32[1,96], index: 4, kind: input, shape index: {}]
  %s5 = inlined_call_operand.hbm [shape: f32[16,96], index: 5, kind: output, shape index: {}]
  %s6 = sld [smem:[#allocation0]]
  $region50: #{transformer_block_forward.5} parent=0
    _
  %s8 = ssub.s32 1, %s6
  %s9 = scalar_select 0, %s8, %s6
  $region1: #{transformer_block_forward.5} parent=0
    #allocation2 [shape = 'u8[8192]{0}', space=vmem, size = 0x2000, scoped, tag = 'input window, operand 0, single buffered']
    #allocation3 [shape = 's32[1]{0}', space=sflag, size = 0x4, scoped, tag = 'scoped memory for transformer_block_forward.5']
    #allocation4 [shape = 's32[1]{0}', space=sflag, size = 0x4, scoped, tag = 'scoped memory for transformer_block_forward.5']
    #allocation5 [shape = 'u8[512]{0}', space=vmem, size = 0x400, scoped, tag = 'input window, operand 1, single buffered']
    #allocation6 [shape = 's32[1]{0}', space=sflag, size = 0x4, scoped, tag = 'scoped memory for transformer_block_forward.5']
    #allocation7 [shape = 'u8[512]{0}', space=vmem, size = 0x400, scoped, tag = 'input window, operand 2, single buffered']
    #allocation8 [shape = 'u8[16384]{0}', space=vmem, size = 0x4000, scoped, tag = 'input window, operand 3, single buffered']
    #allocation9 [shape = 's32[1]{0}', space=sflag, size = 0x4, scoped, tag = 'scoped memory for transformer_block_forward.5']
    #allocation10 [shape = 'u8[512]{0}', space=vmem, size = 0x400, scoped, tag = 'input window, operand 4, single buffered']
    #allocation11 [shape = 'u8[8192]{0}', space=vmem, size = 0x2000, scoped, tag = 'output window, operand 0, single buffered']
    %10 = vsyncpa [#allocation3], 0
    %11 = vsyncpa [#allocation6], 0
    %12 = vsyncpa [#allocation9], 0
    %13 = vsyncpa [#allocation4], 0
    // Predicated region
    $region2: #{transformer_block_forward.5} parent=1 // pred_check
      _
    $region3: #{transformer_block_forward.5} parent=1 // pred_check_branch
      %15 = sbr.rel (0) target = $region5
    $region4: #{transformer_block_forward.5} parent=1 // pred_region
      %s17 = ssub.s32 256, 256
      %18 = vsyncadd [#allocation3], %s17
      %s19 = sshll.u32 [#allocation2], 4
      %s20 = int_to_ptr.vmem [resolvable:$true] %s19
      %25 = dma.hbm_to_vmem [thread:$0]  %s0, 256, %s20, [#allocation3], 128, 128, 8
    $region5: #{transformer_block_forward.5} parent=1 // pred_fallthru
      _
    // Predicated region
    $region6: #{transformer_block_forward.5} parent=1 // pred_check
      _
    $region7: #{transformer_block_forward.5} parent=1 // pred_check_branch
      %27 = sbr.rel (0) target = $region9
    $region8: #{transformer_block_forward.5} parent=1 // pred_region
      %s29 = ssub.s32 16, 16
      %30 = vsyncadd [#allocation6], %s29
      %s32 = sshll.u32 [#allocation5], 4
      %s33 = int_to_ptr.vmem [resolvable:$true] %s32
      %35 = dma.hbm_to_vmem [thread:$0]  %s1, 16, %s33, [#allocation6]
    $region9: #{transformer_block_forward.5} parent=1 // pred_fallthru
      _
    // Predicated region
    $region10: #{transformer_block_forward.5} parent=1 // pred_check
      _
    $region11: #{transformer_block_forward.5} parent=1 // pred_check_branch
      %37 = sbr.rel (0) target = $region13
    $region12: #{transformer_block_forward.5} parent=1 // pred_region
      %s39 = ssub.s32 16, 16
      %40 = vsyncadd [#allocation6], %s39
      %s42 = sshll.u32 [#allocation7], 4
      %s43 = int_to_ptr.vmem [resolvable:$true] %s42
      %45 = dma.hbm_to_vmem [thread:$0]  %s2, 16, %s43, [#allocation6]
    $region13: #{transformer_block_forward.5} parent=1 // pred_fallthru
      _
    // Predicated region
    $region14: #{transformer_block_forward.5} parent=1 // pred_check
      _
    $region15: #{transformer_block_forward.5} parent=1 // pred_check_branch
      %47 = sbr.rel (0) target = $region17
    $region16: #{transformer_block_forward.5} parent=1 // pred_region
      %s49 = ssub.s32 512, 512
      %50 = vsyncadd [#allocation9], %s49
      %s51 = sshll.u32 [#allocation8], 4
      %s52 = int_to_ptr.vmem [resolvable:$true] %s51
      %57 = dma.hbm_to_vmem [thread:$0]  %s3, 512, %s52, [#allocation9], 128, 128, 8
    $region17: #{transformer_block_forward.5} parent=1 // pred_fallthru
      _
    // Predicated region
    $region18: #{transformer_block_forward.5} parent=1 // pred_check
      _
    $region19: #{transformer_block_forward.5} parent=1 // pred_check_branch
      %59 = sbr.rel (0) target = $region21
    $region20: #{transformer_block_forward.5} parent=1 // pred_region
      %s61 = ssub.s32 16, 16
      %62 = vsyncadd [#allocation9], %s61
      %s64 = sshll.u32 [#allocation10], 4
      %s65 = int_to_ptr.vmem [resolvable:$true] %s64
      %67 = dma.hbm_to_vmem [thread:$0]  %s4, 16, %s65, [#allocation9]
    $region21: #{transformer_block_forward.5} parent=1 // pred_fallthru
      _
    // Predicated region
    $region22: #{transformer_block_forward.5} parent=1 // pred_check
      _
    $region23: #{transformer_block_forward.5} parent=1 // pred_check_branch
      %69 = sbr.rel (0) target = $region25
    $region24: #{transformer_block_forward.5} parent=1 // pred_region
      %70 = dma.done [#allocation3], 256
    $region25: #{transformer_block_forward.5} parent=1 // pred_fallthru
      _
    // Predicated region
    $region26: #{transformer_block_forward.5} parent=1 // pred_check
      _
    $region27: #{transformer_block_forward.5} parent=1 // pred_check_branch
      %72 = sbr.rel (0) target = $region29
    $region28: #{transformer_block_forward.5} parent=1 // pred_region
      %73 = dma.done [#allocation6], 16
    $region29: #{transformer_block_forward.5} parent=1 // pred_fallthru
      _
    // Predicated region
    $region30: #{transformer_block_forward.5} parent=1 // pred_check
      _
    $region31: #{transformer_block_forward.5} parent=1 // pred_check_branch
      %75 = sbr.rel (0) target = $region33
    $region32: #{transformer_block_forward.5} parent=1 // pred_region
      %76 = dma.done [#allocation6], 16
    $region33: #{transformer_block_forward.5} parent=1 // pred_fallthru
      _
    // Predicated region
    $region34: #{transformer_block_forward.5} parent=1 // pred_check
      _
    $region35: #{transformer_block_forward.5} parent=1 // pred_check_branch
      %78 = sbr.rel (0) target = $region37
    $region36: #{transformer_block_forward.5} parent=1 // pred_region
      %79 = dma.done [#allocation9], 512
    $region37: #{transformer_block_forward.5} parent=1 // pred_fallthru
      _
    // Predicated region
    $region38: #{transformer_block_forward.5} parent=1 // pred_check
      _
    $region39: #{transformer_block_forward.5} parent=1 // pred_check_branch
      %81 = sbr.rel (0) target = $region41
    $region40: #{transformer_block_forward.5} parent=1 // pred_region
      %82 = dma.done [#allocation9], 16
    $region41: #{transformer_block_forward.5} parent=1 // pred_fallthru
      _
    %v83 = vld [vmem:[#allocation2] sm:$0xff]
    %v84 = vld [vmem:[#allocation2 + $0x8] sm:$0xff]
    %vm85 = vcmask 261120
    %v86 = vsel %vm85, %v83, 0.0
    %87 = vadd.xlane.f32.xlu0 %v86
    %v88 = vpop.xlane.xlu0 %87
    %v89 = vsel %vm85, %v84, 0.0
    %90 = vadd.xlane.f32.xlu0 %v89
    %v91 = vpop.xlane.xlu0 %90
    %v92 = vrcp.pop 32.0
    %v93 = vmul.f32 %v88, %v92
    %v94 = vmul.f32 %v91, %v92
    %v95 = vsub.f32 %v83, %v93
    %v96 = vsub.f32 %v84, %v94
    %v97 = vmul.f32 %v95, %v95
    %v98 = vmul.f32 %v96, %v96
    %v99 = vsel %vm85, %v97, 0.0
    %100 = vadd.xlane.f32.xlu0 %v99
    %v101 = vpop.xlane.xlu0 %100
    %v102 = vsel %vm85, %v98, 0.0
    %103 = vadd.xlane.f32.xlu0 %v102
    %v104 = vpop.xlane.xlu0 %103
    %v105 = vmul.f32 %v101, %v92
    %v106 = vmul.f32 %v104, %v92
    %v107 = vadd.f32 %v105, 1e-05
    %v108 = vadd.f32 %v106, 1e-05
    %v109 = vrsqrt.pop %v107
    %v110 = vrsqrt.pop %v108
    %v111 = vmul.f32 %v95, %v109
    %v112 = vmul.f32 %v96, %v110
    %v113 = vld [vmem:[#allocation5] sm:$0x1]
    %v115 = vlaneseq
    %v116 = vshrl.u32 %v115, 7
    %v117 = vsub.s32 0, %v116
    %v118 = vrot.slane %v113, %v117
    %v120 = vmul.f32 %v111, %v118
    %v121 = vmul.f32 %v112, %v118
    %v122 = vld [vmem:[#allocation7] sm:$0x1]
    %v124 = vlaneseq
    %v125 = vshrl.u32 %v124, 7
    %v126 = vsub.s32 0, %v125
    %v127 = vrot.slane %v122, %v126
    %v129 = vadd.f32 %v120, %v127
    %v130 = vadd.f32 %v121, %v127
    %v131 = vld [vmem:[#allocation8] sm:$0xff]
    %v132 = vld [vmem:[#allocation8 + $0x8] sm:$0xff]
    %v133 = vld [vmem:[#allocation8 + $0x10] sm:$0xff]
    %v134 = vld [vmem:[#allocation8 + $0x18] sm:$0xff]
    %v135 = vld [vmem:[#allocation10] sm:$0x1]
    %v137 = vlaneseq
    %v138 = vshrl.u32 %v137, 7
    %v139 = vsub.s32 0, %v138
    %v140 = vrot.slane %v135, %v139
    %v143 = vsel %vm85, %v129, 0
    %v146 = vsel %vm85, %v130, 0
    %148 = vmatprep.subr.mxu0 0.0
    %149 = vmatpush1.msra.mxu0 %v131
    %150 = vmatprep.subr.mxu0 0.0
    %151 = vmatpush1.msra.mxu0 %v132
    %152 = vmatprep.subr.mxu0 0.0
    %153 = vmatpush1.msra.mxu0 %v133
    %154 = vmatprep.subr.mxu0 0.0
    %155 = vmatpush1.msra.mxu0 %v134
    %156 = vmatprep.subr.mxu0 0.0
    %157 = vmatpush1.msra.mxu0 0.0
    %158 = vmatprep.subr.mxu0 0.0
    %159 = vmatpush1.msra.mxu0 0.0
    %160 = vmatprep.subr.mxu0 0.0
    %161 = vmatpush1.msra.mxu0 0.0
    %162 = vmatprep.subr.mxu0 0.0
    %163 = vmatpush1.msra.mxu0 0.0
    %164 = vmatprep.subr.mxu0 0.0
    %165 = vmatpush1.msra.mxu0 0.0
    %166 = vmatprep.subr.mxu0 0.0
    %167 = vmatpush1.msra.mxu0 0.0
    %168 = vmatprep.subr.mxu0 0.0
    %169 = vmatpush1.msra.mxu0 0.0
    %170 = vmatprep.subr.mxu0 0.0
    %171 = vmatpush1.msra.mxu0 0.0
    %172 = vmatprep.subr.mxu0 0.0
    %173 = vmatpush1.msra.mxu0 0.0
    %174 = vmatprep.subr.mxu0 0.0
    %175 = vmatpush1.msra.mxu0 0.0
    %176 = vmatprep.subr.mxu0 0.0
    %177 = vmatpush1.msra.mxu0 0.0
    %178 = vmatprep.subr.mxu0 0.0
    %179 = vmatpush1.msra.mxu0 0.0
    %180 = vmatprep.subr.mxu0 0.0
    %181 = vmatpush1.msra.mxu0 0.0
    %182 = vmatprep.subr.mxu0 0.0
    %183 = vmatpush1.msra.mxu0 0.0
    %184 = vmatprep.subr.mxu0 0.0
    %185 = vmatpush1.msra.mxu0 0.0
    %186 = vmatprep.subr.mxu0 0.0
    %187 = vmatpush1.msra.mxu0 0.0
    %188 = vmatprep.subr.mxu0 0.0
    %189 = vmatpush1.msra.mxu0 0.0
    %190 = vmatprep.subr.mxu0 0.0
    %191 = vmatpush1.msra.mxu0 0.0
    %192 = vmatprep.subr.mxu0 0.0
    %193 = vmatpush1.msra.mxu0 0.0
    %194 = vmatprep.subr.mxu0 0.0
    %195 = vmatpush1.msra.mxu0 0.0
    %196 = vmatprep.subr.mxu0 0.0
    %197 = vmatpush1.msra.mxu0 0.0
    %198 = vmatprep.subr.mxu0 0.0
    %199 = vmatpush1.msra.mxu0 0.0
    %200 = vmatprep.subr.mxu0 0.0
    %201 = vmatpush1.msra.mxu0 0.0
    %202 = vmatprep.subr.mxu0 0.0
    %203 = vmatpush1.msra.mxu0 0.0
    %204 = vmatprep.subr.mxu0 0.0
    %205 = vmatpush1.msra.mxu0 0.0
    %206 = vmatprep.subr.mxu0 0.0
    %207 = vmatpush1.msra.mxu0 0.0
    %208 = vmatprep.subr.mxu0 0.0
    %209 = vmatpush1.msra.mxu0 0.0
    %210 = vmatprep.subr.mxu0 0.0
    %211 = vmatpush1.msra.mxu0 0.0
    %212 = vmatprep.mubr.f32.mxu0 0.0
    %213 = vmatmul.mubr.f32.gmra.mrb[0].mxu0 %v143
    %v214 = vpop.f32.mrb[0].mxu0
    %v215 = vadd.f32 %v140, %v214
    %v216 = vpop.f32.mrb[0].mxu0
    %217 = vmatprep.mubr.f32.mxu0 0.0
    %218 = vmatmul.mubr.f32.gmra.mrb[0].mxu0 %v146
    %v219 = vpop.f32.mrb[0].mxu0
    %v220 = vadd.f32 %v140, %v219
    %v221 = vpop.f32.mrb[0].mxu0
    %222 = vdwg.mxu0
    %vm223 = vcmask 785408
    %224 = vst.msk [vmem:[#allocation11] sm:$0xff] %vm223, %v215
    %225 = vst.msk [vmem:[#allocation11 + $0x8] sm:$0xff] %vm223, %v220
    // Predicated region
    $region42: #{transformer_block_forward.5} parent=1 // pred_check
      _
    $region43: #{transformer_block_forward.5} parent=1 // pred_check_branch
      %227 = sbr.rel (0) target = $region45
    $region44: #{transformer_block_forward.5} parent=1 // pred_region
      %s229 = ssub.s32 256, 256
      %230 = vsyncadd [#allocation4], %s229
      %s231 = sshll.u32 [#allocation11], 4
      %s232 = int_to_ptr.vmem [resolvable:$true] %s231
      %237 = dma.vmem_to_hbm [thread:$0]  %s232, 256, %s5, [#allocation4], 128, 128, 8
    $region45: #{transformer_block_forward.5} parent=1 // pred_fallthru
      _
    // Predicated region
    $region46: #{transformer_block_forward.5} parent=1 // pred_check
      _
    $region47: #{transformer_block_forward.5} parent=1 // pred_check_branch
      %239 = sbr.rel (0) target = $region49
    $region48: #{transformer_block_forward.5} parent=1 // pred_region
      %240 = dma.done [#allocation4], 256
    $region49: #{transformer_block_forward.5} parent=1 // pred_fallthru
      _
    %241 = vsyncpa [#allocation3], 1
    %242 = vsyncpa [#allocation6], 1
    %243 = vsyncpa [#allocation9], 1
    %244 = vsyncpa [#allocation4], 1

// kernel: transformer_block_forward.7
$region0: #{transformer_block_forward.7}
  #allocation0 [shape = 'u32[]', space=smem, size = 0x4, offset = 0x4, fixed_abs, tag = 'smem constant byte address 0x4 - core index']
  #allocation1 [shape = 'u32[144,128]{1,0:T(1,128)}', space=vmem, size = 0x12000, scoped, tag = 'internal scratch']
  #allocation2 [shape = 'f32[16,32]{1,0:T(8,128)}', space=vmem, size = 0x2000, scoped, tag = 'scratch operand']
  %s0 = inlined_call_operand.hbm [shape: f32[16,32], index: 0, kind: input, shape index: {}]
  %s1 = inlined_call_operand.hbm [shape: f32[32,32], index: 1, kind: input, shape index: {}]
  %s2 = inlined_call_operand.hbm [shape: f32[1,32], index: 2, kind: input, shape index: {}]
  %s3 = inlined_call_operand.hbm [shape: f32[16,32], index: 3, kind: input, shape index: {}]
  %s4 = inlined_call_operand.hbm [shape: f32[16,32], index: 4, kind: output, shape index: {}]
  %s5 = sld [smem:[#allocation0]]
  $region50: #{transformer_block_forward.7} parent=0
    _
  %s7 = ssub.s32 1, %s5
  %s8 = scalar_select 0, %s7, %s5
  $region1: #{transformer_block_forward.7} parent=0
    #allocation3 [shape = 'u8[8192]{0}', space=vmem, size = 0x2000, scoped, tag = 'input window, operand 0, single buffered']
    #allocation4 [shape = 's32[1]{0}', space=sflag, size = 0x4, scoped, tag = 'scoped memory for transformer_block_forward.7']
    #allocation5 [shape = 's32[1]{0}', space=sflag, size = 0x4, scoped, tag = 'scoped memory for transformer_block_forward.7']
    #allocation6 [shape = 'u8[16384]{0}', space=vmem, size = 0x4000, scoped, tag = 'input window, operand 1, single buffered']
    #allocation7 [shape = 's32[1]{0}', space=sflag, size = 0x4, scoped, tag = 'scoped memory for transformer_block_forward.7']
    #allocation8 [shape = 'u8[512]{0}', space=vmem, size = 0x400, scoped, tag = 'input window, operand 2, single buffered']
    #allocation9 [shape = 'u8[8192]{0}', space=vmem, size = 0x2000, scoped, tag = 'input window, operand 3, single buffered']
    #allocation10 [shape = 's32[1]{0}', space=sflag, size = 0x4, scoped, tag = 'scoped memory for transformer_block_forward.7']
    #allocation11 [shape = 'u8[8192]{0}', space=vmem, size = 0x2000, scoped, tag = 'output window, operand 0, single buffered']
    %9 = vsyncpa [#allocation4], 0
    %10 = vsyncpa [#allocation7], 0
    %11 = vsyncpa [#allocation10], 0
    %12 = vsyncpa [#allocation5], 0
    // Predicated region
    $region2: #{transformer_block_forward.7} parent=1 // pred_check
      _
    $region3: #{transformer_block_forward.7} parent=1 // pred_check_branch
      %14 = sbr.rel (0) target = $region5
    $region4: #{transformer_block_forward.7} parent=1 // pred_region
      %s16 = ssub.s32 256, 256
      %17 = vsyncadd [#allocation4], %s16
      %s18 = sshll.u32 [#allocation3], 4
      %s19 = int_to_ptr.vmem [resolvable:$true] %s18
      %24 = dma.hbm_to_vmem [thread:$0]  %s0, 256, %s19, [#allocation4], 128, 128, 8
    $region5: #{transformer_block_forward.7} parent=1 // pred_fallthru
      _
    // Predicated region
    $region6: #{transformer_block_forward.7} parent=1 // pred_check
      _
    $region7: #{transformer_block_forward.7} parent=1 // pred_check_branch
      %26 = sbr.rel (0) target = $region9
    $region8: #{transformer_block_forward.7} parent=1 // pred_region
      %s28 = ssub.s32 512, 512
      %29 = vsyncadd [#allocation7], %s28
      %s30 = sshll.u32 [#allocation6], 4
      %s31 = int_to_ptr.vmem [resolvable:$true] %s30
      %36 = dma.hbm_to_vmem [thread:$0]  %s1, 512, %s31, [#allocation7], 128, 128, 8
    $region9: #{transformer_block_forward.7} parent=1 // pred_fallthru
      _
    // Predicated region
    $region10: #{transformer_block_forward.7} parent=1 // pred_check
      _
    $region11: #{transformer_block_forward.7} parent=1 // pred_check_branch
      %38 = sbr.rel (0) target = $region13
    $region12: #{transformer_block_forward.7} parent=1 // pred_region
      %s40 = ssub.s32 16, 16
      %41 = vsyncadd [#allocation7], %s40
      %s43 = sshll.u32 [#allocation8], 4
      %s44 = int_to_ptr.vmem [resolvable:$true] %s43
      %46 = dma.hbm_to_vmem [thread:$0]  %s2, 16, %s44, [#allocation7]
    $region13: #{transformer_block_forward.7} parent=1 // pred_fallthru
      _
    // Predicated region
    $region14: #{transformer_block_forward.7} parent=1 // pred_check
      _
    $region15: #{transformer_block_forward.7} parent=1 // pred_check_branch
      %48 = sbr.rel (0) target = $region17
    $region16: #{transformer_block_forward.7} parent=1 // pred_region
      %s50 = ssub.s32 256, 256
      %51 = vsyncadd [#allocation10], %s50
      %s52 = sshll.u32 [#allocation9], 4
      %s53 = int_to_ptr.vmem [resolvable:$true] %s52
      %58 = dma.hbm_to_vmem [thread:$0]  %s3, 256, %s53, [#allocation10], 128, 128, 8
    $region17: #{transformer_block_forward.7} parent=1 // pred_fallthru
      _
    // Predicated region
    $region18: #{transformer_block_forward.7} parent=1 // pred_check
      _
    $region19: #{transformer_block_forward.7} parent=1 // pred_check_branch
      %60 = sbr.rel (0) target = $region21
    $region20: #{transformer_block_forward.7} parent=1 // pred_region
      %61 = dma.done [#allocation4], 256
    $region21: #{transformer_block_forward.7} parent=1 // pred_fallthru
      _
    // Predicated region
    $region22: #{transformer_block_forward.7} parent=1 // pred_check
      _
    $region23: #{transformer_block_forward.7} parent=1 // pred_check_branch
      %63 = sbr.rel (0) target = $region25
    $region24: #{transformer_block_forward.7} parent=1 // pred_region
      %64 = dma.done [#allocation7], 512
    $region25: #{transformer_block_forward.7} parent=1 // pred_fallthru
      _
    // Predicated region
    $region26: #{transformer_block_forward.7} parent=1 // pred_check
      _
    $region27: #{transformer_block_forward.7} parent=1 // pred_check_branch
      %66 = sbr.rel (0) target = $region29
    $region28: #{transformer_block_forward.7} parent=1 // pred_region
      %67 = dma.done [#allocation7], 16
    $region29: #{transformer_block_forward.7} parent=1 // pred_fallthru
      _
    // Predicated region
    $region30: #{transformer_block_forward.7} parent=1 // pred_check
      _
    $region31: #{transformer_block_forward.7} parent=1 // pred_check_branch
      %69 = sbr.rel (0) target = $region33
    $region32: #{transformer_block_forward.7} parent=1 // pred_region
      %70 = dma.done [#allocation10], 256
    $region33: #{transformer_block_forward.7} parent=1 // pred_fallthru
      _
    %p71 = scmp.eq.s32.totalorder 0, 0
    // Predicated region
    $region34: #{transformer_block_forward.7} parent=1 // pred_check
      %p72 = pneg %p71
    $region35: #{transformer_block_forward.7} parent=1 // pred_check_branch
      %74 = sbr.rel (%p72) target = $region37
    $region36: #{transformer_block_forward.7} parent=1 // pred_region
      %vm75 = vcmask 261120
      %76 = vst.msk [vmem:[#allocation2] sm:$0xff] %vm75, 0.0
      %77 = vst.msk [vmem:[#allocation2 + $0x8] sm:$0xff] %vm75, 0.0
    $region37: #{transformer_block_forward.7} parent=1 // pred_fallthru
      _
    %v78 = vld [vmem:[#allocation2] sm:$0xff]
    %v79 = vld [vmem:[#allocation2 + $0x8] sm:$0xff]
    %v80 = vld [vmem:[#allocation3] sm:$0xff]
    %v81 = vld [vmem:[#allocation3 + $0x8] sm:$0xff]
    %v82 = vld [vmem:[#allocation6] sm:$0xff]
    %v83 = vld [vmem:[#allocation6 + $0x8] sm:$0xff]
    %v84 = vld [vmem:[#allocation6 + $0x10] sm:$0xff]
    %v85 = vld [vmem:[#allocation6 + $0x18] sm:$0xff]
    %vm86 = vcmask 261120
    %v88 = vsel %vm86, %v80, 0
    %v91 = vsel %vm86, %v81, 0
    %93 = vmatprep.subr.mxu0 0.0
    %94 = vmatpush1.msra.mxu0 %v82
    %95 = vmatprep.subr.mxu0 0.0
    %96 = vmatpush1.msra.mxu0 %v83
    %97 = vmatprep.subr.mxu0 0.0
    %98 = vmatpush1.msra.mxu0 %v84
    %99 = vmatprep.subr.mxu0 0.0
    %100 = vmatpush1.msra.mxu0 %v85
    %101 = vmatprep.subr.mxu0 0.0
    %102 = vmatpush1.msra.mxu0 0.0
    %103 = vmatprep.subr.mxu0 0.0
    %104 = vmatpush1.msra.mxu0 0.0
    %105 = vmatprep.subr.mxu0 0.0
    %106 = vmatpush1.msra.mxu0 0.0
    %107 = vmatprep.subr.mxu0 0.0
    %108 = vmatpush1.msra.mxu0 0.0
    %109 = vmatprep.subr.mxu0 0.0
    %110 = vmatpush1.msra.mxu0 0.0
    %111 = vmatprep.subr.mxu0 0.0
    %112 = vmatpush1.msra.mxu0 0.0
    %113 = vmatprep.subr.mxu0 0.0
    %114 = vmatpush1.msra.mxu0 0.0
    %115 = vmatprep.subr.mxu0 0.0
    %116 = vmatpush1.msra.mxu0 0.0
    %117 = vmatprep.subr.mxu0 0.0
    %118 = vmatpush1.msra.mxu0 0.0
    %119 = vmatprep.subr.mxu0 0.0
    %120 = vmatpush1.msra.mxu0 0.0
    %121 = vmatprep.subr.mxu0 0.0
    %122 = vmatpush1.msra.mxu0 0.0
    %123 = vmatprep.subr.mxu0 0.0
    %124 = vmatpush1.msra.mxu0 0.0
    %125 = vmatprep.subr.mxu0 0.0
    %126 = vmatpush1.msra.mxu0 0.0
    %127 = vmatprep.subr.mxu0 0.0
    %128 = vmatpush1.msra.mxu0 0.0
    %129 = vmatprep.subr.mxu0 0.0
    %130 = vmatpush1.msra.mxu0 0.0
    %131 = vmatprep.subr.mxu0 0.0
    %132 = vmatpush1.msra.mxu0 0.0
    %133 = vmatprep.subr.mxu0 0.0
    %134 = vmatpush1.msra.mxu0 0.0
    %135 = vmatprep.subr.mxu0 0.0
    %136 = vmatpush1.msra.mxu0 0.0
    %137 = vmatprep.subr.mxu0 0.0
    %138 = vmatpush1.msra.mxu0 0.0
    %139 = vmatprep.subr.mxu0 0.0
    %140 = vmatpush1.msra.mxu0 0.0
    %141 = vmatprep.subr.mxu0 0.0
    %142 = vmatpush1.msra.mxu0 0.0
    %143 = vmatprep.subr.mxu0 0.0
    %144 = vmatpush1.msra.mxu0 0.0
    %145 = vmatprep.subr.mxu0 0.0
    %146 = vmatpush1.msra.mxu0 0.0
    %147 = vmatprep.subr.mxu0 0.0
    %148 = vmatpush1.msra.mxu0 0.0
    %149 = vmatprep.subr.mxu0 0.0
    %150 = vmatpush1.msra.mxu0 0.0
    %151 = vmatprep.subr.mxu0 0.0
    %152 = vmatpush1.msra.mxu0 0.0
    %153 = vmatprep.subr.mxu0 0.0
    %154 = vmatpush1.msra.mxu0 0.0
    %155 = vmatprep.subr.mxu0 0.0
    %156 = vmatpush1.msra.mxu0 0.0
    %157 = vmatprep.mubr.f32.mxu0 0.0
    %158 = vmatmul.mubr.f32.gmra.mrb[0].mxu0 %v88
    %v159 = vpop.f32.mrb[0].mxu0
    %v160 = vadd.f32 0.0, %v159
    %v161 = vpop.f32.mrb[0].mxu0
    %162 = vmatprep.mubr.f32.mxu0 0.0
    %163 = vmatmul.mubr.f32.gmra.mrb[0].mxu0 %v91
    %v164 = vpop.f32.mrb[0].mxu0
    %v165 = vadd.f32 0.0, %v164
    %v166 = vpop.f32.mrb[0].mxu0
    %167 = vdwg.mxu0
    %v168 = vadd.f32 %v78, %v160
    %v169 = vadd.f32 %v79, %v165
    %170 = vst.msk [vmem:[#allocation2] sm:$0xff] %vm86, %v168
    %171 = vst.msk [vmem:[#allocation2 + $0x8] sm:$0xff] %vm86, %v169
    // Predicated region
    $region38: #{transformer_block_forward.7} parent=1 // pred_check
      %p172 = pneg %p71
    $region39: #{transformer_block_forward.7} parent=1 // pred_check_branch
      %174 = sbr.rel (%p172) target = $region41
    $region40: #{transformer_block_forward.7} parent=1 // pred_region
      %v175 = vld [vmem:[#allocation2] sm:$0xff]
      %v176 = vld [vmem:[#allocation2 + $0x8] sm:$0xff]
      %v177 = vld [vmem:[#allocation8] sm:$0x1]
      %v179 = vlaneseq
      %v180 = vshrl.u32 %v179, 7
      %v181 = vsub.s32 0, %v180
      %v182 = vrot.slane %v177, %v181
      %v184 = vadd.f32 %v175, %v182
      %v185 = vadd.f32 %v176, %v182
      %v186 = vld [vmem:[#allocation9] sm:$0xff]
      %v187 = vld [vmem:[#allocation9 + $0x8] sm:$0xff]
      %v188 = vadd.f32 %v184, %v186
      %v189 = vadd.f32 %v185, %v187
      %190 = vst.msk [vmem:[#allocation11] sm:$0xff] %vm86, %v188
      %191 = vst.msk [vmem:[#allocation11 + $0x8] sm:$0xff] %vm86, %v189
    $region41: #{transformer_block_forward.7} parent=1 // pred_fallthru
      _
    // Predicated region
    $region42: #{transformer_block_forward.7} parent=1 // pred_check
      _
    $region43: #{transformer_block_forward.7} parent=1 // pred_check_branch
      %193 = sbr.rel (0) target = $region45
    $region44: #{transformer_block_forward.7} parent=1 // pred_region
      %s195 = ssub.s32 256, 256
      %196 = vsyncadd [#allocation5], %s195
      %s197 = sshll.u32 [#allocation11], 4
      %s198 = int_to_ptr.vmem [resolvable:$true] %s197
      %203 = dma.vmem_to_hbm [thread:$0]  %s198, 256, %s4, [#allocation5], 128, 128, 8
    $region45: #{transformer_block_forward.7} parent=1 // pred_fallthru
      _
    // Predicated region
    $region46: #{transformer_block_forward.7} parent=1 // pred_check
      _
    $region47: #{transformer_block_forward.7} parent=1 // pred_check_branch
      %205 = sbr.rel (0) target = $region49
    $region48: #{transformer_block_forward.7} parent=1 // pred_region
      %206 = dma.done [#allocation5], 256
    $region49: #{transformer_block_forward.7} parent=1 // pred_fallthru
      _
    %207 = vsyncpa [#allocation4], 1
    %208 = vsyncpa [#allocation7], 1
    %209 = vsyncpa [#allocation10], 1
    %210 = vsyncpa [#allocation5], 1

// kernel: transformer_block_forward.6
$region0: #{transformer_block_forward.6}
  #allocation0 [shape = 'u32[]', space=smem, size = 0x4, offset = 0x4, fixed_abs, tag = 'smem constant byte address 0x4 - core index']
  #allocation1 [shape = 'u32[144,128]{1,0:T(1,128)}', space=vmem, size = 0x12000, scoped, tag = 'internal scratch']
  #allocation2 [shape = 'f32[8,1]{1,0:T(8,128)}', space=vmem, size = 0x1000, scoped, tag = 'scratch operand']
  #allocation3 [shape = 'f32[8,1]{1,0:T(8,128)}', space=vmem, size = 0x1000, scoped, tag = 'scratch operand']
  #allocation4 [shape = 'f32[8,8]{1,0:T(8,128)}', space=vmem, size = 0x1000, scoped, tag = 'scratch operand']
  %s0 = inlined_call_operand.hbm [shape: f32[2,4,8,8], index: 0, kind: input, shape index: {}]
  %s1 = inlined_call_operand.hbm [shape: f32[2,4,8,8], index: 1, kind: input, shape index: {}]
  %s2 = inlined_call_operand.hbm [shape: f32[2,4,8,8], index: 2, kind: input, shape index: {}]
  %s3 = inlined_call_operand.hbm [shape: f32[2,1,8,8], index: 3, kind: input, shape index: {}]
  %s4 = inlined_call_operand.hbm [shape: f32[2,4,8,8], index: 4, kind: output, shape index: {}]
  %s5 = sld [smem:[#allocation0]]
  $region73: #{transformer_block_forward.6} parent=0
    _
  %s7 = ssub.s32 1, %s5
  %s8 = scalar_select 0, %s7, %s5
  $region1: #{transformer_block_forward.6} parent=0
    #allocation5 [shape = 'u8[8192]{0}', space=vmem, size = 0x2000, scoped, tag = 'input window, operand 0']
    #allocation6 [shape = 's32[2]{0}', space=sflag, size = 0x8, scoped, tag = 'scoped memory for transformer_block_forward.6']
    #allocation7 [shape = 's32[2]{0}', space=sflag, size = 0x8, scoped, tag = 'scoped memory for transformer_block_forward.6']
    #allocation8 [shape = 'u8[8192]{0}', space=vmem, size = 0x2000, scoped, tag = 'input window, operand 1']
    #allocation9 [shape = 's32[2]{0}', space=sflag, size = 0x8, scoped, tag = 'scoped memory for transformer_block_forward.6']
    #allocation10 [shape = 'u8[8192]{0}', space=vmem, size = 0x2000, scoped, tag = 'input window, operand 2']
    #allocation11 [shape = 'u8[8192]{0}', space=vmem, size = 0x2000, scoped, tag = 'input window, operand 3']
    #allocation12 [shape = 's32[2]{0}', space=sflag, size = 0x8, scoped, tag = 'scoped memory for transformer_block_forward.6']
    #allocation13 [shape = 'u8[8192]{0}', space=vmem, size = 0x2000, scoped, tag = 'output window, operand 0']
    %9 = vsyncpa [#allocation6], 0
    %s10 = scalar_lea.sflag [#allocation6], 1
    %11 = vsyncpa %s10, 0
    %12 = vsyncpa [#allocation9], 0
    %s13 = scalar_lea.sflag [#allocation9], 1
    %14 = vsyncpa %s13, 0
    %15 = vsyncpa [#allocation12], 0
    %s16 = scalar_lea.sflag [#allocation12], 1
    %17 = vsyncpa %s16, 0
    %18 = vsyncpa [#allocation7], 0
    %s19 = scalar_lea.sflag [#allocation7], 1
    %20 = vsyncpa %s19, 0
    loop: start=0, step=1, limit=10
    $region2: #{transformer_block_forward.6} parent=1 // loop_pre_header
      _
    $region3: #{transformer_block_forward.6} parent=1 // loop_header
      %s22 = sphi 0, %s26
      %p23 = scmp.ge.s32.totalorder %s22, 10
      %s29 = sphi 0, %s55
      %s30 = sphi 0, %s51
      %s31 = sphi 0, %s47
      %s32 = sphi 0, %s43
      %s33 = sphi 0, %s29
      %s34 = sphi 0, %s30
      %s35 = sphi 0, %s31
      %s36 = sphi 0, %s32
      %s37 = sphi 0, %s33
      %s38 = sphi 0, %s34
      %s39 = sphi 0, %s35
      %s40 = sphi 0, %s36
      %s62 = sphi 0, %s64
      %s65 = sphi 0, %s62
      %s66 = sphi 0, %s65
      %s82 = sphi 0, %s66
      %s92 = sphi 0, %s94
      %s95 = sphi 0, %s92
      %s96 = sphi 0, %s95
      %s112 = sphi 0, %s96
      %s122 = sphi 0, %s124
      %s125 = sphi 0, %s122
      %s126 = sphi 0, %s125
      %s142 = sphi 0, %s126
      %s152 = sphi 0, %s154
      %s155 = sphi 0, %s152
      %s156 = sphi 0, %s155
      %s172 = sphi 0, %s156
      %s182 = sphi 0, %s184
      %s185 = sphi 0, %s182
      %s186 = sphi 0, %s185
      %s202 = sphi 0, %s186
    $region4: #{transformer_block_forward.6} parent=1 // loop_header_branch
      %25 = sbr.rel (%p23) target = $region8
    $region5: #{transformer_block_forward.6} parent=1 // loop_body
      %s27 = ssub.s32 %s22, 1
      %s28 = ssub.s32 %s22, 2
      %s41 = sadd.s32 1, %s32
      %p42 = scmp.ge.s32.totalorder %s41, 1
      %s43 = scalar_select %p42, 0, %s41
      %s44 = sadd.s32 1, %s31
      %s45 = scalar_select %p42, %s44, %s31
      %p46 = scmp.ge.s32.totalorder %s45, 1
      %s47 = scalar_select %p46, 0, %s45
      %s48 = sadd.s32 1, %s30
      %s49 = scalar_select %p46, %s48, %s30
      %p50 = scmp.ge.s32.totalorder %s49, 4
      %s51 = scalar_select %p50, 0, %s49
      %s52 = sadd.s32 1, %s29
      %s53 = scalar_select %p50, %s52, %s29
      %p54 = scmp.ge.s32.totalorder %s53, 2
      %s55 = scalar_select %p54, 0, %s53
      %s56 = ssub.s32 %s29, %s55
      %s57 = ssub.s32 %s30, %s51
      %s58 = sor.u32 %s56, %s57
      %s59 = ssub.s32 %s31, %s47
      %s60 = sor.u32 %s58, %s59
      %p61 = scmp.eq.s32.totalorder %s60, 0
      %s63 = sadd.s32 %s62, 1
      %s64 = scalar_select %p61, %s62, %s63
      %p67 = pneg %p61
      %p68 = scmp.eq.s32.totalorder %s22, 7
      %p69 = por %p67, %p68
      %p70 = scmp.ne.s32.totalorder %s62, %s65
      %p71 = scmp.eq.s32.totalorder %s22, 0
      %p72 = por %p70, %p71
      %p73 = scmp.ne.s32.totalorder %s62, %s65
      %p74 = scmp.eq.s32.totalorder %s27, 7
      %p75 = por %p73, %p74
      %p76 = scmp.ne.s32.totalorder %s65, %s66
      %p77 = scmp.eq.s32.totalorder %s27, 0
      %p78 = por %p76, %p77
      %p79 = scmp.ne.s32.totalorder %s65, %s66
      %p80 = scmp.eq.s32.totalorder %s28, 7
      %p81 = por %p79, %p80
      %p83 = scmp.ne.s32.totalorder %s66, %s82
      %p84 = scmp.eq.s32.totalorder %s28, 0
      %p85 = por %p83, %p84
      %s86 = ssub.s32 %s29, %s55
      %s87 = ssub.s32 %s30, %s51
      %s88 = sor.u32 %s86, %s87
      %s89 = ssub.s32 %s32, %s43
      %s90 = sor.u32 %s88, %s89
      %p91 = scmp.eq.s32.totalorder %s90, 0
      %s93 = sadd.s32 %s92, 1
      %s94 = scalar_select %p91, %s92, %s93
      %p97 = pneg %p91
      %p98 = scmp.eq.s32.totalorder %s22, 7
      %p99 = por %p97, %p98
      %p100 = scmp.ne.s32.totalorder %s92, %s95
      %p101 = scmp.eq.s32.totalorder %s22, 0
      %p102 = por %p100, %p101
      %p103 = scmp.ne.s32.totalorder %s92, %s95
      %p104 = scmp.eq.s32.totalorder %s27, 7
      %p105 = por %p103, %p104
      %p106 = scmp.ne.s32.totalorder %s95, %s96
      %p107 = scmp.eq.s32.totalorder %s27, 0
      %p108 = por %p106, %p107
      %p109 = scmp.ne.s32.totalorder %s95, %s96
      %p110 = scmp.eq.s32.totalorder %s28, 7
      %p111 = por %p109, %p110
      %p113 = scmp.ne.s32.totalorder %s96, %s112
      %p114 = scmp.eq.s32.totalorder %s28, 0
      %p115 = por %p113, %p114
      %s116 = ssub.s32 %s29, %s55
      %s117 = ssub.s32 %s30, %s51
      %s118 = sor.u32 %s116, %s117
      %s119 = ssub.s32 %s32, %s43
      %s120 = sor.u32 %s118, %s119
      %p121 = scmp.eq.s32.totalorder %s120, 0
      %s123 = sadd.s32 %s122, 1
      %s124 = scalar_select %p121, %s122, %s123
      %p127 = pneg %p121
      %p128 = scmp.eq.s32.totalorder %s22, 7
      %p129 = por %p127, %p128
      %p130 = scmp.ne.s32.totalorder %s122, %s125
      %p131 = scmp.eq.s32.totalorder %s22, 0
      %p132 = por %p130, %p131
      %p133 = scmp.ne.s32.totalorder %s122, %s125
      %p134 = scmp.eq.s32.totalorder %s27, 7
      %p135 = por %p133, %p134
      %p136 = scmp.ne.s32.totalorder %s125, %s126
      %p137 = scmp.eq.s32.totalorder %s27, 0
      %p138 = por %p136, %p137
      %p139 = scmp.ne.s32.totalorder %s125, %s126
      %p140 = scmp.eq.s32.totalorder %s28, 7
      %p141 = por %p139, %p140
      %p143 = scmp.ne.s32.totalorder %s126, %s142
      %p144 = scmp.eq.s32.totalorder %s28, 0
      %p145 = por %p143, %p144
      %s146 = ssub.s32 %s29, %s55
      %s147 = ssub.s32 %s31, %s47
      %s148 = sor.u32 %s146, %s147
      %s149 = ssub.s32 %s32, %s43
      %s150 = sor.u32 %s148, %s149
      %p151 = scmp.eq.s32.totalorder %s150, 0
      %s153 = sadd.s32 %s152, 1
      %s154 = scalar_select %p151, %s152, %s153
      %p157 = pneg %p151
      %p158 = scmp.eq.s32.totalorder %s22, 7
      %p159 = por %p157, %p158
      %p160 = scmp.ne.s32.totalorder %s152, %s155
      %p161 = scmp.eq.s32.totalorder %s22, 0
      %p162 = por %p160, %p161
      %p163 = scmp.ne.s32.totalorder %s152, %s155
      %p164 = scmp.eq.s32.totalorder %s27, 7
      %p165 = por %p163, %p164
      %p166 = scmp.ne.s32.totalorder %s155, %s156
      %p167 = scmp.eq.s32.totalorder %s27, 0
      %p168 = por %p166, %p167
      %p169 = scmp.ne.s32.totalorder %s155, %s156
      %p170 = scmp.eq.s32.totalorder %s28, 7
      %p171 = por %p169, %p170
      %p173 = scmp.ne.s32.totalorder %s156, %s172
      %p174 = scmp.eq.s32.totalorder %s28, 0
      %p175 = por %p173, %p174
      %s176 = ssub.s32 %s29, %s55
      %s177 = ssub.s32 %s30, %s51
      %s178 = sor.u32 %s176, %s177
      %s179 = ssub.s32 %s31, %s47
      %s180 = sor.u32 %s178, %s179
      %p181 = scmp.eq.s32.totalorder %s180, 0
      %s183 = sadd.s32 %s182, 1
      %s184 = scalar_select %p181, %s182, %s183
      %p187 = pneg %p181
      %p188 = scmp.eq.s32.totalorder %s22, 7
      %p189 = por %p187, %p188
      %p190 = scmp.ne.s32.totalorder %s182, %s185
      %p191 = scmp.eq.s32.totalorder %s22, 0
      %p192 = por %p190, %p191
      %p193 = scmp.ne.s32.totalorder %s182, %s185
      %p194 = scmp.eq.s32.totalorder %s27, 7
      %p195 = por %p193, %p194
      %p196 = scmp.ne.s32.totalorder %s185, %s186
      %p197 = scmp.eq.s32.totalorder %s27, 0
      %p198 = por %p196, %p197
      %p199 = scmp.ne.s32.totalorder %s185, %s186
      %p200 = scmp.eq.s32.totalorder %s28, 7
      %p201 = por %p199, %p200
      %p203 = scmp.ne.s32.totalorder %s186, %s202
      %p204 = scmp.eq.s32.totalorder %s28, 0
      %p205 = por %p203, %p204
      %p206 = scmp.le.s32.totalorder 1, %s22
      %p207 = scmp.lt.s32.totalorder %s22, 9
      %p208 = pnand %p206, %p207
      %p209 = pneg %p208
      // Predicated region
      $region9: #{transformer_block_forward.6} parent=5 // pred_check
        _
      $region10: #{transformer_block_forward.6} parent=5 // pred_check_branch
        %211 = sbr.rel (%p208) target = $region12
      $region11: #{transformer_block_forward.6} parent=5 // pred_region
        %s212 = ssub.s32 %s22, 1
      $region12: #{transformer_block_forward.6} parent=5 // pred_fallthru
        _
      %p213 = scmp.lt.s32.totalorder %s22, 8
      // Predicated region
      $region13: #{transformer_block_forward.6} parent=5 // pred_check
        %p214 = pneg %p213
      $region14: #{transformer_block_forward.6} parent=5 // pred_check_branch
        %216 = sbr.rel (%p214) target = $region16
      $region15: #{transformer_block_forward.6} parent=5 // pred_region
        // Predicated region
        $region17: #{transformer_block_forward.6} parent=15 // pred_check
          %p217 = pneg %p72
        $region18: #{transformer_block_forward.6} parent=15 // pred_check_branch
          %219 = sbr.rel (%p217) target = $region20
        $region19: #{transformer_block_forward.6} parent=15 // pred_region
          %s220 = sand.u32 %s62, 1
          %s221 = scalar_lea.sflag [#allocation6], %s220
          %s222 = sand.u32 %s62, 1
          %s223 = smul.addr %s222, 8
          %s224 = scalar_lea.vmem [#allocation5], %s223
          %s226 = ssub.s32 128, 128
          %227 = vsyncadd %s221, %s226
          %s228 = sadd.s32 %s31, %s30
          %s229 = smul.addr %s29, 4
          %s230 = sadd.s32 %s228, %s229
          %s231 = smul.addr %s230, 128
          %s232 = scalar_lea.hbm %s0, %s231
          %s234 = sshll.u32 %s224, 4
          %s235 = int_to_ptr.vmem [resolvable:$true] %s234
          %237 = dma.hbm_to_vmem [thread:$0]  %s232, 128, %s235, %s221
        $region20: #{transformer_block_forward.6} parent=15 // pred_fallthru
          _
        // Predicated region
        $region21: #{transformer_block_forward.6} parent=15 // pred_check
          %p238 = pneg %p102
        $region22: #{transformer_block_forward.6} parent=15 // pred_check_branch
          %240 = sbr.rel (%p238) target = $region24
        $region23: #{transformer_block_forward.6} parent=15 // pred_region
          %s241 = sand.u32 %s22, 1
          %s242 = scalar_lea.sflag [#allocation9], %s241
          %s243 = sand.u32 %s92, 1
          %s244 = smul.addr %s243, 8
          %s245 = scalar_lea.vmem [#allocation8], %s244
          %s247 = ssub.s32 128, 128
          %248 = vsyncadd %s242, %s247
          %s249 = sadd.s32 %s32, %s30
          %s250 = smul.addr %s29, 4
          %s251 = sadd.s32 %s249, %s250
          %s252 = smul.addr %s251, 128
          %s253 = scalar_lea.hbm %s1, %s252
          %s255 = sshll.u32 %s245, 4
          %s256 = int_to_ptr.vmem [resolvable:$true] %s255
          %258 = dma.hbm_to_vmem [thread:$0]  %s253, 128, %s256, %s242
        $region24: #{transformer_block_forward.6} parent=15 // pred_fallthru
          _
        // Predicated region
        $region25: #{transformer_block_forward.6} parent=15 // pred_check
          %p259 = pneg %p132
        $region26: #{transformer_block_forward.6} parent=15 // pred_check_branch
          %261 = sbr.rel (%p259) target = $region28
        $region27: #{transformer_block_forward.6} parent=15 // pred_region
          %s262 = sand.u32 %s22, 1
          %s263 = scalar_lea.sflag [#allocation9], %s262
          %s264 = sand.u32 %s122, 1
          %s265 = smul.addr %s264, 8
          %s266 = scalar_lea.vmem [#allocation10], %s265
          %s268 = ssub.s32 128, 128
          %269 = vsyncadd %s263, %s268
          %s270 = sadd.s32 %s32, %s30
          %s271 = smul.addr %s29, 4
          %s272 = sadd.s32 %s270, %s271
          %s273 = smul.addr %s272, 128
          %s274 = scalar_lea.hbm %s2, %s273
          %s276 = sshll.u32 %s266, 4
          %s277 = int_to_ptr.vmem [resolvable:$true] %s276
          %279 = dma.hbm_to_vmem [thread:$0]  %s274, 128, %s277, %s263
        $region28: #{transformer_block_forward.6} parent=15 // pred_fallthru
          _
        // Predicated region
        $region29: #{transformer_block_forward.6} parent=15 // pred_check
          %p280 = pneg %p162
        $region30: #{transformer_block_forward.6} parent=15 // pred_check_branch
          %282 = sbr.rel (%p280) target = $region32
        $region31: #{transformer_block_forward.6} parent=15 // pred_region
          %s283 = sand.u32 %s152, 1
          %s284 = scalar_lea.sflag [#allocation12], %s283
          %s285 = sand.u32 %s152, 1
          %s286 = smul.addr %s285, 8
          %s287 = scalar_lea.vmem [#allocation11], %s286
          %s289 = ssub.s32 128, 128
          %290 = vsyncadd %s284, %s289
          %s291 = sadd.s32 %s32, %s31
          %s292 = sadd.s32 %s291, %s29
          %s293 = smul.addr %s292, 128
          %s294 = scalar_lea.hbm %s3, %s293
          %s296 = sshll.u32 %s287, 4
          %s297 = int_to_ptr.vmem [resolvable:$true] %s296
          %299 = dma.hbm_to_vmem [thread:$0]  %s294, 128, %s297, %s284
        $region32: #{transformer_block_forward.6} parent=15 // pred_fallthru
          _
      $region16: #{transformer_block_forward.6} parent=5 // pred_fallthru
        _
      %p300 = scmp.le.s32.totalorder 1, %s22
      %p301 = scmp.lt.s32.totalorder %s22, 9
      %p302 = pnand %p300, %p301
      %p303 = pneg %p302
      // Predicated region
      $region33: #{transformer_block_forward.6} parent=5 // pred_check
        _
      $region34: #{transformer_block_forward.6} parent=5 // pred_check_branch
        %305 = sbr.rel (%p302) target = $region36
      $region35: #{transformer_block_forward.6} parent=5 // pred_region
        %s306 = ssub.s32 %s22, 1
        %s307 = sand.u32 %s65, 1
        %s308 = scalar_lea.sflag [#allocation6], %s307
        %s309 = sand.u32 %s65, 1
        %s310 = smul.addr %s309, 8
        %s311 = scalar_lea.vmem [#allocation5], %s310
        // Predicated region
        $region37: #{transformer_block_forward.6} parent=35 // pred_check
          %p312 = pneg %p78
        $region38: #{transformer_block_forward.6} parent=35 // pred_check_branch
          %314 = sbr.rel (%p312) target = $region40
        $region39: #{transformer_block_forward.6} parent=35 // pred_region
          %315 = dma.done %s308, 128
        $region40: #{transformer_block_forward.6} parent=35 // pred_fallthru
          _
        %s316 = sand.u32 %s27, 1
        %s317 = scalar_lea.sflag [#allocation9], %s316
        %s318 = sand.u32 %s95, 1
        %s319 = smul.addr %s318, 8
        %s320 = scalar_lea.vmem [#allocation8], %s319
        // Predicated region
        $region41: #{transformer_block_forward.6} parent=35 // pred_check
          %p321 = pneg %p108
        $region42: #{transformer_block_forward.6} parent=35 // pred_check_branch
          %323 = sbr.rel (%p321) target = $region44
        $region43: #{transformer_block_forward.6} parent=35 // pred_region
          %324 = dma.done %s317, 128
        $region44: #{transformer_block_forward.6} parent=35 // pred_fallthru
          _
        %s325 = sand.u32 %s27, 1
        %s326 = scalar_lea.sflag [#allocation9], %s325
        %s327 = sand.u32 %s125, 1
        %s328 = smul.addr %s327, 8
        %s329 = scalar_lea.vmem [#allocation10], %s328
        // Predicated region
        $region45: #{transformer_block_forward.6} parent=35 // pred_check
          %p330 = pneg %p138
        $region46: #{transformer_block_forward.6} parent=35 // pred_check_branch
          %332 = sbr.rel (%p330) target = $region48
        $region47: #{transformer_block_forward.6} parent=35 // pred_region
          %333 = dma.done %s326, 128
        $region48: #{transformer_block_forward.6} parent=35 // pred_fallthru
          _
        %s334 = sand.u32 %s155, 1
        %s335 = scalar_lea.sflag [#allocation12], %s334
        %s336 = sand.u32 %s155, 1
        %s337 = smul.addr %s336, 8
        %s338 = scalar_lea.vmem [#allocation11], %s337
        // Predicated region
        $region49: #{transformer_block_forward.6} parent=35 // pred_check
          %p339 = pneg %p168
        $region50: #{transformer_block_forward.6} parent=35 // pred_check_branch
          %341 = sbr.rel (%p339) target = $region52
        $region51: #{transformer_block_forward.6} parent=35 // pred_region
          %342 = dma.done %s335, 128
        $region52: #{transformer_block_forward.6} parent=35 // pred_fallthru
          _
        %s343 = sand.u32 %s65, 1
        %s344 = scalar_lea.sflag [#allocation6], %s343
        %s345 = sand.u32 %s65, 1
        %s346 = smul.addr %s345, 8
        %s347 = scalar_lea.vmem [#allocation5], %s346
        %p348 = pneg %p78
        %p349 = pneg %p75
        %s350 = sand.u32 %s27, 1
        %s351 = scalar_lea.sflag [#allocation9], %s350
        %s352 = sand.u32 %s95, 1
        %s353 = smul.addr %s352, 8
        %s354 = scalar_lea.vmem [#allocation8], %s353
        %p355 = pneg %p108
        %p356 = pneg %p105
        %s357 = sand.u32 %s27, 1
        %s358 = scalar_lea.sflag [#allocation9], %s357
        %s359 = sand.u32 %s125, 1
        %s360 = smul.addr %s359, 8
        %s361 = scalar_lea.vmem [#allocation10], %s360
        %p362 = pneg %p138
        %p363 = pneg %p135
        %s364 = sand.u32 %s155, 1
        %s365 = scalar_lea.sflag [#allocation12], %s364
        %s366 = sand.u32 %s155, 1
        %s367 = smul.addr %s366, 8
        %s368 = scalar_lea.vmem [#allocation11], %s367
        %p369 = pneg %p168
        %p370 = pneg %p165
        %p371 = pneg %p198
        %p372 = pneg %p195
        %s373 = sand.u32 %s185, 1
        %s374 = scalar_lea.sflag [#allocation7], %s373
        %s375 = sand.u32 %s185, 1
        %s376 = smul.addr %s375, 8
        %s377 = scalar_lea.vmem [#allocation13], %s376
        %p378 = scmp.eq.s32.totalorder %s36, 0
        // Predicated region
        $region53: #{transformer_block_forward.6} parent=35 // pred_check
          %p379 = pneg %p378
        $region54: #{transformer_block_forward.6} parent=35 // pred_check_branch
          %381 = sbr.rel (%p379) target = $region56
        $region55: #{transformer_block_forward.6} parent=35 // pred_region
          %vm382 = vcmask 7168
          %383 = vst.msk [vmem:[#allocation2] sm:$0xff] %vm382, -inf
          %384 = vst.msk [vmem:[#allocation3] sm:$0xff] %vm382, 0.0
          %vm385 = vcmask 64512
          %386 = vst.msk [vmem:[#allocation4] sm:$0xff] %vm385, 0.0
        $region56: #{transformer_block_forward.6} parent=35 // pred_fallthru
          _
        %v387 = vld [vmem:[%s311] sm:$0xff]
        %v388 = vmul.f32 %v387, 0.35355338
        %v389 = vld [vmem:[%s320] sm:$0xff]
        %vm390 = vcmask 64512
        %v392 = vsel %vm390, %v388, 0
        %v395 = vsel %vm390, %v389, 0
        %397 = vmatprep.subr.mxu0 0.0
        %398 = vmatpush1.xpose.msra.mxu0 %v395
        %399 = vmatprep.subr.mxu0 0.0
        %400 = vmatpush1.xpose.msra.mxu0 0.0
        %401 = vmatprep.subr.mxu0 0.0
        %402 = vmatpush1.xpose.msra.mxu0 0.0
        %403 = vmatprep.subr.mxu0 0.0
        %404 = vmatpush1.xpose.msra.mxu0 0.0
        %405 = vmatprep.subr.mxu0 0.0
        %406 = vmatpush1.xpose.msra.mxu0 0.0
        %407 = vmatprep.subr.mxu0 0.0
        %408 = vmatpush1.xpose.msra.mxu0 0.0
        %409 = vmatprep.subr.mxu0 0.0
        %410 = vmatpush1.xpose.msra.mxu0 0.0
        %411 = vmatprep.subr.mxu0 0.0
        %412 = vmatpush1.xpose.msra.mxu0 0.0
        %413 = vmatprep.subr.mxu0 0.0
        %414 = vmatpush1.xpose.msra.mxu0 0.0
        %415 = vmatprep.subr.mxu0 0.0
        %416 = vmatpush1.xpose.msra.mxu0 0.0
        %417 = vmatprep.subr.mxu0 0.0
        %418 = vmatpush1.xpose.msra.mxu0 0.0
        %419 = vmatprep.subr.mxu0 0.0
        %420 = vmatpush1.xpose.msra.mxu0 0.0
        %421 = vmatprep.subr.mxu0 0.0
        %422 = vmatpush1.xpose.msra.mxu0 0.0
        %423 = vmatprep.subr.mxu0 0.0
        %424 = vmatpush1.xpose.msra.mxu0 0.0
        %425 = vmatprep.subr.mxu0 0.0
        %426 = vmatpush1.xpose.msra.mxu0 0.0
        %427 = vmatprep.subr.mxu0 0.0
        %428 = vmatpush1.xpose.msra.mxu0 0.0
        %429 = vmatprep.subr.mxu0 0.0
        %430 = vmatpush1.xpose.msra.mxu0 0.0
        %431 = vmatprep.subr.mxu0 0.0
        %432 = vmatpush1.xpose.msra.mxu0 0.0
        %433 = vmatprep.subr.mxu0 0.0
        %434 = vmatpush1.xpose.msra.mxu0 0.0
        %435 = vmatprep.subr.mxu0 0.0
        %436 = vmatpush1.xpose.msra.mxu0 0.0
        %437 = vmatprep.subr.mxu0 0.0
        %438 = vmatpush1.xpose.msra.mxu0 0.0
        %439 = vmatprep.subr.mxu0 0.0
        %440 = vmatpush1.xpose.msra.mxu0 0.0
        %441 = vmatprep.subr.mxu0 0.0
        %442 = vmatpush1.xpose.msra.mxu0 0.0
        %443 = vmatprep.subr.mxu0 0.0
        %444 = vmatpush1.xpose.msra.mxu0 0.0
        %445 = vmatprep.subr.mxu0 0.0
        %446 = vmatpush1.xpose.msra.mxu0 0.0
        %447 = vmatprep.subr.mxu0 0.0
        %448 = vmatpush1.xpose.msra.mxu0 0.0
        %449 = vmatprep.subr.mxu0 0.0
        %450 = vmatpush1.xpose.msra.mxu0 0.0
        %451 = vmatprep.subr.mxu0 0.0
        %452 = vmatpush1.xpose.msra.mxu0 0.0
        %453 = vmatprep.subr.mxu0 0.0
        %454 = vmatpush1.xpose.msra.mxu0 0.0
        %455 = vmatprep.subr.mxu0 0.0
        %456 = vmatpush1.xpose.msra.mxu0 0.0
        %457 = vmatprep.subr.mxu0 0.0
        %458 = vmatpush1.xpose.msra.mxu0 0.0
        %459 = vmatprep.subr.mxu0 0.0
        %460 = vmatpush1.xpose.msra.mxu0 0.0
        %461 = vmatprep.mubr.f32.mxu0 0.0
        %462 = vmatmul.mubr.f32.gmra.mrb[0].mxu0 %v392
        %v463 = vpop.f32.mrb[0].mxu0
        %v464 = vadd.f32 0.0, %v463
        %v465 = vpop.f32.mrb[0].mxu0
        %466 = vdwg.mxu0
        %v467 = vld [vmem:[%s338] sm:$0xff]
        %vm468 = vcmp.ne.f32.partialorder %v467, 0.0
        %v469 = vsel %vm468, %v464, -1e+30
        %v470 = vld [vmem:[#allocation2] sm:$0xff]
        %v471 = vsel %vm390, %v469, -inf
        %472 = vmax.xlane.f32.xlu0 %v471
        %v473 = vpop.xlane.xlu0 %472
        %v474 = vmax.f32 %v470, %v473
        %v475 = vsub.f32 %v470, %v474
        %v476 = vmul.f32 %v475, 1.442695
        %v477 = vpow.pop %v476
        %479 = vset.pattern.permute.xlu0 0
        %480 = vperm.xlu0 %479, %v474
        %v481 = vpop.permute.xlu0 %480
        %v483 = vsub.f32 %v469, %v481
        %v484 = vmul.f32 %v483, 1.442695
        %v485 = vpow.pop %v484
        %v486 = vld [vmem:[#allocation3] sm:$0xff]
        %v487 = vmul.f32 %v477, %v486
        %v488 = vsel %vm390, %v485, 0.0
        %489 = vadd.xlane.f32.xlu0 %v488
        %v490 = vpop.xlane.xlu0 %489
        %v491 = vadd.f32 %v487, %v490
        %vm492 = vcmask 7168
        %493 = vst.msk [vmem:[#allocation3] sm:$0xff] %vm492, %v491
        %v494 = vld [vmem:[#allocation4] sm:$0xff]
        %496 = vset.pattern.permute.xlu0 0
        %497 = vperm.xlu0 %496, %v477
        %v498 = vpop.permute.xlu0 %497
        %v500 = vmul.f32 %v498, %v494
        %v501 = vld [vmem:[%s329] sm:$0xff]
        %v503 = vsel %vm390, %v485, 0
        %505 = vmatprep.subr.mxu0 0.0
        %506 = vmatpush1.msra.mxu0 %v501
        %507 = vmatprep.subr.mxu0 0.0
        %508 = vmatpush1.msra.mxu0 0.0
        %509 = vmatprep.subr.mxu0 0.0
        %510 = vmatpush1.msra.mxu0 0.0
        %511 = vmatprep.subr.mxu0 0.0
        %512 = vmatpush1.msra.mxu0 0.0
        %513 = vmatprep.subr.mxu0 0.0
        %514 = vmatpush1.msra.mxu0 0.0
        %515 = vmatprep.subr.mxu0 0.0
        %516 = vmatpush1.msra.mxu0 0.0
        %517 = vmatprep.subr.mxu0 0.0
        %518 = vmatpush1.msra.mxu0 0.0
        %519 = vmatprep.subr.mxu0 0.0
        %520 = vmatpush1.msra.mxu0 0.0
        %521 = vmatprep.subr.mxu0 0.0
        %522 = vmatpush1.msra.mxu0 0.0
        %523 = vmatprep.subr.mxu0 0.0
        %524 = vmatpush1.msra.mxu0 0.0
        %525 = vmatprep.subr.mxu0 0.0
        %526 = vmatpush1.msra.mxu0 0.0
        %527 = vmatprep.subr.mxu0 0.0
        %528 = vmatpush1.msra.mxu0 0.0
        %529 = vmatprep.subr.mxu0 0.0
        %530 = vmatpush1.msra.mxu0 0.0
        %531 = vmatprep.subr.mxu0 0.0
        %532 = vmatpush1.msra.mxu0 0.0
        %533 = vmatprep.subr.mxu0 0.0
        %534 = vmatpush1.msra.mxu0 0.0
        %535 = vmatprep.subr.mxu0 0.0
        %536 = vmatpush1.msra.mxu0 0.0
        %537 = vmatprep.subr.mxu0 0.0
        %538 = vmatpush1.msra.mxu0 0.0
        %539 = vmatprep.subr.mxu0 0.0
        %540 = vmatpush1.msra.mxu0 0.0
        %541 = vmatprep.subr.mxu0 0.0
        %542 = vmatpush1.msra.mxu0 0.0
        %543 = vmatprep.subr.mxu0 0.0
        %544 = vmatpush1.msra.mxu0 0.0
        %545 = vmatprep.subr.mxu0 0.0
        %546 = vmatpush1.msra.mxu0 0.0
        %547 = vmatprep.subr.mxu0 0.0
        %548 = vmatpush1.msra.mxu0 0.0
        %549 = vmatprep.subr.mxu0 0.0
        %550 = vmatpush1.msra.mxu0 0.0
        %551 = vmatprep.subr.mxu0 0.0
        %552 = vmatpush1.msra.mxu0 0.0
        %553 = vmatprep.subr.mxu0 0.0
        %554 = vmatpush1.msra.mxu0 0.0
        %555 = vmatprep.subr.mxu0 0.0
        %556 = vmatpush1.msra.mxu0 0.0
        %557 = vmatprep.subr.mxu0 0.0
        %558 = vmatpush1.msra.mxu0 0.0
        %559 = vmatprep.subr.mxu0 0.0
        %560 = vmatpush1.msra.mxu0 0.0
        %561 = vmatprep.subr.mxu0 0.0
        %562 = vmatpush1.msra.mxu0 0.0
        %563 = vmatprep.subr.mxu0 0.0
        %564 = vmatpush1.msra.mxu0 0.0
        %565 = vmatprep.subr.mxu0 0.0
        %566 = vmatpush1.msra.mxu0 0.0
        %567 = vmatprep.subr.mxu0 0.0
        %568 = vmatpush1.msra.mxu0 0.0
        %569 = vmatprep.mubr.f32.mxu0 0.0
        %570 = vmatmul.mubr.f32.gmra.mrb[0].mxu0 %v503
        %v571 = vpop.f32.mrb[0].mxu0
        %v572 = vadd.f32 0.0, %v571
        %v573 = vpop.f32.mrb[0].mxu0
        %574 = vdwg.mxu0
        %v575 = vadd.f32 %v500, %v572
        %576 = vst.msk [vmem:[#allocation4] sm:$0xff] %vm390, %v575
        %577 = vst.msk [vmem:[#allocation2] sm:$0xff] %vm492, %v474
        // Predicated region
        $region57: #{transformer_block_forward.6} parent=35 // pred_check
          %p578 = pneg %p378
        $region58: #{transformer_block_forward.6} parent=35 // pred_check_branch
          %580 = sbr.rel (%p578) target = $region60
        $region59: #{transformer_block_forward.6} parent=35 // pred_region
          %v581 = vld [vmem:[#allocation3] sm:$0xff]
          %v582 = vrcp.pop %v581
          %v583 = vld [vmem:[#allocation4] sm:$0xff]
          %585 = vset.pattern.permute.xlu0 0
          %586 = vperm.xlu0 %585, %v582
          %v587 = vpop.permute.xlu0 %586
          %v589 = vmul.f32 %v583, %v587
          %590 = vst.msk [vmem:[%s377] sm:$0xff] %vm390, %v589
        $region60: #{transformer_block_forward.6} parent=35 // pred_fallthru
          _
        %s591 = sand.u32 %s185, 1
        %s592 = scalar_lea.sflag [#allocation7], %s591
        %s593 = sand.u32 %s185, 1
        %s594 = smul.addr %s593, 8
        %s595 = scalar_lea.vmem [#allocation13], %s594
        // Predicated region
        $region61: #{transformer_block_forward.6} parent=35 // pred_check
          %p596 = pneg %p195
        $region62: #{transformer_block_forward.6} parent=35 // pred_check_branch
          %598 = sbr.rel (%p596) target = $region64
        $region63: #{transformer_block_forward.6} parent=35 // pred_region
          %s600 = ssub.s32 128, 128
          %601 = vsyncadd %s592, %s600
          %s602 = sadd.s32 %s35, %s34
          %s603 = smul.addr %s33, 4
          %s604 = sadd.s32 %s602, %s603
          %s605 = smul.addr %s604, 128
          %s606 = scalar_lea.hbm %s4, %s605
          %s608 = sshll.u32 %s595, 4
          %s609 = int_to_ptr.vmem [resolvable:$true] %s608
          %611 = dma.vmem_to_hbm [thread:$0]  %s609, 128, %s606, %s592
        $region64: #{transformer_block_forward.6} parent=35 // pred_fallthru
          _
      $region36: #{transformer_block_forward.6} parent=5 // pred_fallthru
        _
      %p612 = scmp.le.s32.totalorder 2, %s22
      // Predicated region
      $region65: #{transformer_block_forward.6} parent=5 // pred_check
        %p613 = pneg %p612
      $region66: #{transformer_block_forward.6} parent=5 // pred_check_branch
        %615 = sbr.rel (%p613) target = $region68
      $region67: #{transformer_block_forward.6} parent=5 // pred_region
        %s616 = ssub.s32 %s22, 2
        // Predicated region
        $region69: #{transformer_block_forward.6} parent=67 // pred_check
          %p617 = pneg %p201
        $region70: #{transformer_block_forward.6} parent=67 // pred_check_branch
          %619 = sbr.rel (%p617) target = $region72
        $region71: #{transformer_block_forward.6} parent=67 // pred_region
          %s620 = sand.u32 %s186, 1
          %s621 = scalar_lea.sflag [#allocation7], %s620
          %s622 = sand.u32 %s186, 1
          %s623 = smul.addr %s622, 8
          %s624 = scalar_lea.vmem [#allocation13], %s623
          %625 = dma.done %s621, 128
        $region72: #{transformer_block_forward.6} parent=67 // pred_fallthru
          _
      $region68: #{transformer_block_forward.6} parent=5 // pred_fallthru
        _
    $region6: #{transformer_block_forward.6} parent=1 // loop_footer
      %s26 = sadd.s32 1, %s22
    $region7: #{transformer_block_forward.6} parent=1 // loop_footer_branch
      %21 = sbr.rel target = $region3
    $region8: #{transformer_block_forward.6} parent=1 // loop_exit
      _
    %626 = vsyncpa [#allocation6], 1
    %s627 = scalar_lea.sflag [#allocation6], 1
    %628 = vsyncpa %s627, 1
    %629 = vsyncpa [#allocation9], 1
    %s630 = scalar_lea.sflag [#allocation9], 1
    %631 = vsyncpa %s630, 1
    %632 = vsyncpa [#allocation12], 1
    %s633 = scalar_lea.sflag [#allocation12], 1
    %634 = vsyncpa %s633, 1
    %635 = vsyncpa [#allocation7], 1
    %s636 = scalar_lea.sflag [#allocation7], 1
    %637 = vsyncpa %s636, 1

// kernel: transformer_block_forward.8
$region0: #{transformer_block_forward.8}
  #allocation0 [shape = 'u32[]', space=smem, size = 0x4, offset = 0x4, fixed_abs, tag = 'smem constant byte address 0x4 - core index']
  #allocation1 [shape = 'u32[144,128]{1,0:T(1,128)}', space=vmem, size = 0x12000, scoped, tag = 'internal scratch']
  %s0 = inlined_call_operand.hbm [shape: f32[16,32], index: 0, kind: input, shape index: {}]
  %s1 = inlined_call_operand.hbm [shape: f32[1,32], index: 1, kind: input, shape index: {}]
  %s2 = inlined_call_operand.hbm [shape: f32[1,32], index: 2, kind: input, shape index: {}]
  %s3 = inlined_call_operand.hbm [shape: f32[32,128], index: 3, kind: input, shape index: {}]
  %s4 = inlined_call_operand.hbm [shape: f32[1,128], index: 4, kind: input, shape index: {}]
  %s5 = inlined_call_operand.hbm [shape: f32[16,128], index: 5, kind: output, shape index: {}]
  %s6 = sld [smem:[#allocation0]]
  $region50: #{transformer_block_forward.8} parent=0
    _
  %s8 = ssub.s32 1, %s6
  %s9 = scalar_select 0, %s8, %s6
  $region1: #{transformer_block_forward.8} parent=0
    #allocation2 [shape = 'u8[8192]{0}', space=vmem, size = 0x2000, scoped, tag = 'input window, operand 0, single buffered']
    #allocation3 [shape = 's32[1]{0}', space=sflag, size = 0x4, scoped, tag = 'scoped memory for transformer_block_forward.8']
    #allocation4 [shape = 's32[1]{0}', space=sflag, size = 0x4, scoped, tag = 'scoped memory for transformer_block_forward.8']
    #allocation5 [shape = 'u8[512]{0}', space=vmem, size = 0x400, scoped, tag = 'input window, operand 1, single buffered']
    #allocation6 [shape = 's32[1]{0}', space=sflag, size = 0x4, scoped, tag = 'scoped memory for transformer_block_forward.8']
    #allocation7 [shape = 'u8[512]{0}', space=vmem, size = 0x400, scoped, tag = 'input window, operand 2, single buffered']
    #allocation8 [shape = 'u8[16384]{0}', space=vmem, size = 0x4000, scoped, tag = 'input window, operand 3, single buffered']
    #allocation9 [shape = 's32[1]{0}', space=sflag, size = 0x4, scoped, tag = 'scoped memory for transformer_block_forward.8']
    #allocation10 [shape = 'u8[512]{0}', space=vmem, size = 0x400, scoped, tag = 'input window, operand 4, single buffered']
    #allocation11 [shape = 'u8[8192]{0}', space=vmem, size = 0x2000, scoped, tag = 'output window, operand 0, single buffered']
    %10 = vsyncpa [#allocation3], 0
    %11 = vsyncpa [#allocation6], 0
    %12 = vsyncpa [#allocation9], 0
    %13 = vsyncpa [#allocation4], 0
    // Predicated region
    $region2: #{transformer_block_forward.8} parent=1 // pred_check
      _
    $region3: #{transformer_block_forward.8} parent=1 // pred_check_branch
      %15 = sbr.rel (0) target = $region5
    $region4: #{transformer_block_forward.8} parent=1 // pred_region
      %s17 = ssub.s32 256, 256
      %18 = vsyncadd [#allocation3], %s17
      %s19 = sshll.u32 [#allocation2], 4
      %s20 = int_to_ptr.vmem [resolvable:$true] %s19
      %25 = dma.hbm_to_vmem [thread:$0]  %s0, 256, %s20, [#allocation3], 128, 128, 8
    $region5: #{transformer_block_forward.8} parent=1 // pred_fallthru
      _
    // Predicated region
    $region6: #{transformer_block_forward.8} parent=1 // pred_check
      _
    $region7: #{transformer_block_forward.8} parent=1 // pred_check_branch
      %27 = sbr.rel (0) target = $region9
    $region8: #{transformer_block_forward.8} parent=1 // pred_region
      %s29 = ssub.s32 16, 16
      %30 = vsyncadd [#allocation6], %s29
      %s32 = sshll.u32 [#allocation5], 4
      %s33 = int_to_ptr.vmem [resolvable:$true] %s32
      %35 = dma.hbm_to_vmem [thread:$0]  %s1, 16, %s33, [#allocation6]
    $region9: #{transformer_block_forward.8} parent=1 // pred_fallthru
      _
    // Predicated region
    $region10: #{transformer_block_forward.8} parent=1 // pred_check
      _
    $region11: #{transformer_block_forward.8} parent=1 // pred_check_branch
      %37 = sbr.rel (0) target = $region13
    $region12: #{transformer_block_forward.8} parent=1 // pred_region
      %s39 = ssub.s32 16, 16
      %40 = vsyncadd [#allocation6], %s39
      %s42 = sshll.u32 [#allocation7], 4
      %s43 = int_to_ptr.vmem [resolvable:$true] %s42
      %45 = dma.hbm_to_vmem [thread:$0]  %s2, 16, %s43, [#allocation6]
    $region13: #{transformer_block_forward.8} parent=1 // pred_fallthru
      _
    // Predicated region
    $region14: #{transformer_block_forward.8} parent=1 // pred_check
      _
    $region15: #{transformer_block_forward.8} parent=1 // pred_check_branch
      %47 = sbr.rel (0) target = $region17
    $region16: #{transformer_block_forward.8} parent=1 // pred_region
      %s49 = ssub.s32 512, 512
      %50 = vsyncadd [#allocation9], %s49
      %s51 = sshll.u32 [#allocation8], 4
      %s52 = int_to_ptr.vmem [resolvable:$true] %s51
      %57 = dma.hbm_to_vmem [thread:$0]  %s3, 512, %s52, [#allocation9], 128, 128, 8
    $region17: #{transformer_block_forward.8} parent=1 // pred_fallthru
      _
    // Predicated region
    $region18: #{transformer_block_forward.8} parent=1 // pred_check
      _
    $region19: #{transformer_block_forward.8} parent=1 // pred_check_branch
      %59 = sbr.rel (0) target = $region21
    $region20: #{transformer_block_forward.8} parent=1 // pred_region
      %s61 = ssub.s32 16, 16
      %62 = vsyncadd [#allocation9], %s61
      %s64 = sshll.u32 [#allocation10], 4
      %s65 = int_to_ptr.vmem [resolvable:$true] %s64
      %67 = dma.hbm_to_vmem [thread:$0]  %s4, 16, %s65, [#allocation9]
    $region21: #{transformer_block_forward.8} parent=1 // pred_fallthru
      _
    // Predicated region
    $region22: #{transformer_block_forward.8} parent=1 // pred_check
      _
    $region23: #{transformer_block_forward.8} parent=1 // pred_check_branch
      %69 = sbr.rel (0) target = $region25
    $region24: #{transformer_block_forward.8} parent=1 // pred_region
      %70 = dma.done [#allocation3], 256
    $region25: #{transformer_block_forward.8} parent=1 // pred_fallthru
      _
    // Predicated region
    $region26: #{transformer_block_forward.8} parent=1 // pred_check
      _
    $region27: #{transformer_block_forward.8} parent=1 // pred_check_branch
      %72 = sbr.rel (0) target = $region29
    $region28: #{transformer_block_forward.8} parent=1 // pred_region
      %73 = dma.done [#allocation6], 16
    $region29: #{transformer_block_forward.8} parent=1 // pred_fallthru
      _
    // Predicated region
    $region30: #{transformer_block_forward.8} parent=1 // pred_check
      _
    $region31: #{transformer_block_forward.8} parent=1 // pred_check_branch
      %75 = sbr.rel (0) target = $region33
    $region32: #{transformer_block_forward.8} parent=1 // pred_region
      %76 = dma.done [#allocation6], 16
    $region33: #{transformer_block_forward.8} parent=1 // pred_fallthru
      _
    // Predicated region
    $region34: #{transformer_block_forward.8} parent=1 // pred_check
      _
    $region35: #{transformer_block_forward.8} parent=1 // pred_check_branch
      %78 = sbr.rel (0) target = $region37
    $region36: #{transformer_block_forward.8} parent=1 // pred_region
      %79 = dma.done [#allocation9], 512
    $region37: #{transformer_block_forward.8} parent=1 // pred_fallthru
      _
    // Predicated region
    $region38: #{transformer_block_forward.8} parent=1 // pred_check
      _
    $region39: #{transformer_block_forward.8} parent=1 // pred_check_branch
      %81 = sbr.rel (0) target = $region41
    $region40: #{transformer_block_forward.8} parent=1 // pred_region
      %82 = dma.done [#allocation9], 16
    $region41: #{transformer_block_forward.8} parent=1 // pred_fallthru
      _
    %v83 = vld [vmem:[#allocation2] sm:$0xff]
    %v84 = vld [vmem:[#allocation2 + $0x8] sm:$0xff]
    %vm85 = vcmask 261120
    %v86 = vsel %vm85, %v83, 0.0
    %87 = vadd.xlane.f32.xlu0 %v86
    %v88 = vpop.xlane.xlu0 %87
    %v89 = vsel %vm85, %v84, 0.0
    %90 = vadd.xlane.f32.xlu0 %v89
    %v91 = vpop.xlane.xlu0 %90
    %v92 = vrcp.pop 32.0
    %v93 = vmul.f32 %v88, %v92
    %v94 = vmul.f32 %v91, %v92
    %v95 = vsub.f32 %v83, %v93
    %v96 = vsub.f32 %v84, %v94
    %v97 = vmul.f32 %v95, %v95
    %v98 = vmul.f32 %v96, %v96
    %v99 = vsel %vm85, %v97, 0.0
    %100 = vadd.xlane.f32.xlu0 %v99
    %v101 = vpop.xlane.xlu0 %100
    %v102 = vsel %vm85, %v98, 0.0
    %103 = vadd.xlane.f32.xlu0 %v102
    %v104 = vpop.xlane.xlu0 %103
    %v105 = vmul.f32 %v101, %v92
    %v106 = vmul.f32 %v104, %v92
    %v107 = vadd.f32 %v105, 1e-05
    %v108 = vadd.f32 %v106, 1e-05
    %v109 = vrsqrt.pop %v107
    %v110 = vrsqrt.pop %v108
    %v111 = vmul.f32 %v95, %v109
    %v112 = vmul.f32 %v96, %v110
    %v113 = vld [vmem:[#allocation5] sm:$0x1]
    %v115 = vlaneseq
    %v116 = vshrl.u32 %v115, 7
    %v117 = vsub.s32 0, %v116
    %v118 = vrot.slane %v113, %v117
    %v120 = vmul.f32 %v111, %v118
    %v121 = vmul.f32 %v112, %v118
    %v122 = vld [vmem:[#allocation7] sm:$0x1]
    %v124 = vlaneseq
    %v125 = vshrl.u32 %v124, 7
    %v126 = vsub.s32 0, %v125
    %v127 = vrot.slane %v122, %v126
    %v129 = vadd.f32 %v120, %v127
    %v130 = vadd.f32 %v121, %v127
    %v131 = vld [vmem:[#allocation8] sm:$0xff]
    %v132 = vld [vmem:[#allocation8 + $0x8] sm:$0xff]
    %v133 = vld [vmem:[#allocation8 + $0x10] sm:$0xff]
    %v134 = vld [vmem:[#allocation8 + $0x18] sm:$0xff]
    %v135 = vld [vmem:[#allocation10] sm:$0x1]
    %v137 = vlaneseq
    %v138 = vshrl.u32 %v137, 7
    %v139 = vsub.s32 0, %v138
    %v140 = vrot.slane %v135, %v139
    %v143 = vsel %vm85, %v129, 0
    %v146 = vsel %vm85, %v130, 0
    %148 = vmatprep.subr.mxu0 0.0
    %149 = vmatpush1.msra.mxu0 %v131
    %150 = vmatprep.subr.mxu0 0.0
    %151 = vmatpush1.msra.mxu0 %v132
    %152 = vmatprep.subr.mxu0 0.0
    %153 = vmatpush1.msra.mxu0 %v133
    %154 = vmatprep.subr.mxu0 0.0
    %155 = vmatpush1.msra.mxu0 %v134
    %156 = vmatprep.subr.mxu0 0.0
    %157 = vmatpush1.msra.mxu0 0.0
    %158 = vmatprep.subr.mxu0 0.0
    %159 = vmatpush1.msra.mxu0 0.0
    %160 = vmatprep.subr.mxu0 0.0
    %161 = vmatpush1.msra.mxu0 0.0
    %162 = vmatprep.subr.mxu0 0.0
    %163 = vmatpush1.msra.mxu0 0.0
    %164 = vmatprep.subr.mxu0 0.0
    %165 = vmatpush1.msra.mxu0 0.0
    %166 = vmatprep.subr.mxu0 0.0
    %167 = vmatpush1.msra.mxu0 0.0
    %168 = vmatprep.subr.mxu0 0.0
    %169 = vmatpush1.msra.mxu0 0.0
    %170 = vmatprep.subr.mxu0 0.0
    %171 = vmatpush1.msra.mxu0 0.0
    %172 = vmatprep.subr.mxu0 0.0
    %173 = vmatpush1.msra.mxu0 0.0
    %174 = vmatprep.subr.mxu0 0.0
    %175 = vmatpush1.msra.mxu0 0.0
    %176 = vmatprep.subr.mxu0 0.0
    %177 = vmatpush1.msra.mxu0 0.0
    %178 = vmatprep.subr.mxu0 0.0
    %179 = vmatpush1.msra.mxu0 0.0
    %180 = vmatprep.subr.mxu0 0.0
    %181 = vmatpush1.msra.mxu0 0.0
    %182 = vmatprep.subr.mxu0 0.0
    %183 = vmatpush1.msra.mxu0 0.0
    %184 = vmatprep.subr.mxu0 0.0
    %185 = vmatpush1.msra.mxu0 0.0
    %186 = vmatprep.subr.mxu0 0.0
    %187 = vmatpush1.msra.mxu0 0.0
    %188 = vmatprep.subr.mxu0 0.0
    %189 = vmatpush1.msra.mxu0 0.0
    %190 = vmatprep.subr.mxu0 0.0
    %191 = vmatpush1.msra.mxu0 0.0
    %192 = vmatprep.subr.mxu0 0.0
    %193 = vmatpush1.msra.mxu0 0.0
    %194 = vmatprep.subr.mxu0 0.0
    %195 = vmatpush1.msra.mxu0 0.0
    %196 = vmatprep.subr.mxu0 0.0
    %197 = vmatpush1.msra.mxu0 0.0
    %198 = vmatprep.subr.mxu0 0.0
    %199 = vmatpush1.msra.mxu0 0.0
    %200 = vmatprep.subr.mxu0 0.0
    %201 = vmatpush1.msra.mxu0 0.0
    %202 = vmatprep.subr.mxu0 0.0
    %203 = vmatpush1.msra.mxu0 0.0
    %204 = vmatprep.subr.mxu0 0.0
    %205 = vmatpush1.msra.mxu0 0.0
    %206 = vmatprep.subr.mxu0 0.0
    %207 = vmatpush1.msra.mxu0 0.0
    %208 = vmatprep.subr.mxu0 0.0
    %209 = vmatpush1.msra.mxu0 0.0
    %210 = vmatprep.subr.mxu0 0.0
    %211 = vmatpush1.msra.mxu0 0.0
    %212 = vmatprep.mubr.f32.mxu0 0.0
    %213 = vmatmul.mubr.f32.gmra.mrb[0].mxu0 %v143
    %v214 = vpop.f32.mrb[0].mxu0
    %v215 = vadd.f32 %v140, %v214
    %v216 = vpop.f32.mrb[0].mxu0
    %217 = vmatprep.mubr.f32.mxu0 0.0
    %218 = vmatmul.mubr.f32.gmra.mrb[0].mxu0 %v146
    %v219 = vpop.f32.mrb[0].mxu0
    %v220 = vadd.f32 %v140, %v219
    %v221 = vpop.f32.mrb[0].mxu0
    %222 = vdwg.mxu0
    %v223 = vmul.f32 %v215, %v215
    %v224 = vmul.f32 %v220, %v220
    %v225 = vmul.f32 %v215, %v223
    %v226 = vmul.f32 %v220, %v224
    %v227 = vmul.f32 %v225, 0.044715
    %v228 = vmul.f32 %v226, 0.044715
    %v229 = vadd.f32 %v215, %v227
    %v230 = vadd.f32 %v220, %v228
    %v231 = vmul.f32 %v229, 0.7978846
    %v232 = vmul.f32 %v230, 0.7978846
    %v233 = vtanh.pop %v231
    %v234 = vtanh.pop %v232
    %v235 = vadd.f32 %v233, 1.0
    %v236 = vadd.f32 %v234, 1.0
    %v237 = vmul.f32 %v235, 0.5
    %v238 = vmul.f32 %v236, 0.5
    %v239 = vmul.f32 %v215, %v237
    %v240 = vmul.f32 %v220, %v238
    %241 = vst [vmem:[#allocation11] sm:$0xff] %v239
    %242 = vst [vmem:[#allocation11 + $0x8] sm:$0xff] %v240
    // Predicated region
    $region42: #{transformer_block_forward.8} parent=1 // pred_check
      _
    $region43: #{transformer_block_forward.8} parent=1 // pred_check_branch
      %244 = sbr.rel (0) target = $region45
    $region44: #{transformer_block_forward.8} parent=1 // pred_region
      %s246 = ssub.s32 256, 256
      %247 = vsyncadd [#allocation4], %s246
      %s248 = sshll.u32 [#allocation11], 4
      %s249 = int_to_ptr.vmem [resolvable:$true] %s248
      %254 = dma.vmem_to_hbm [thread:$0]  %s249, 256, %s5, [#allocation4], 128, 128, 8
    $region45: #{transformer_block_forward.8} parent=1 // pred_fallthru
      _
    // Predicated region
    $region46: #{transformer_block_forward.8} parent=1 // pred_check
      _
    $region47: #{transformer_block_forward.8} parent=1 // pred_check_branch
      %256 = sbr.rel (0) target = $region49
    $region48: #{transformer_block_forward.8} parent=1 // pred_region
      %257 = dma.done [#allocation4], 256
    $region49: #{transformer_block_forward.8} parent=1 // pred_fallthru
      _
    %258 = vsyncpa [#allocation3], 1
    %259 = vsyncpa [#allocation6], 1
    %260 = vsyncpa [#allocation9], 1
    %261 = vsyncpa [#allocation4], 1

// kernel: transformer_block_forward.9
$region0: #{transformer_block_forward.9}
  #allocation0 [shape = 'u32[]', space=smem, size = 0x4, offset = 0x4, fixed_abs, tag = 'smem constant byte address 0x4 - core index']
  #allocation1 [shape = 'u32[144,128]{1,0:T(1,128)}', space=vmem, size = 0x12000, scoped, tag = 'internal scratch']
  #allocation2 [shape = 'f32[16,32]{1,0:T(8,128)}', space=vmem, size = 0x2000, scoped, tag = 'scratch operand']
  %s0 = inlined_call_operand.hbm [shape: f32[16,128], index: 0, kind: input, shape index: {}]
  %s1 = inlined_call_operand.hbm [shape: f32[128,32], index: 1, kind: input, shape index: {}]
  %s2 = inlined_call_operand.hbm [shape: f32[1,32], index: 2, kind: input, shape index: {}]
  %s3 = inlined_call_operand.hbm [shape: f32[16,32], index: 3, kind: input, shape index: {}]
  %s4 = inlined_call_operand.hbm [shape: f32[16,32], index: 4, kind: output, shape index: {}]
  %s5 = sld [smem:[#allocation0]]
  $region50: #{transformer_block_forward.9} parent=0
    _
  %s7 = ssub.s32 1, %s5
  %s8 = scalar_select 0, %s7, %s5
  $region1: #{transformer_block_forward.9} parent=0
    #allocation3 [shape = 'u8[8192]{0}', space=vmem, size = 0x2000, scoped, tag = 'input window, operand 0, single buffered']
    #allocation4 [shape = 's32[1]{0}', space=sflag, size = 0x4, scoped, tag = 'scoped memory for transformer_block_forward.9']
    #allocation5 [shape = 's32[1]{0}', space=sflag, size = 0x4, scoped, tag = 'scoped memory for transformer_block_forward.9']
    #allocation6 [shape = 'u8[65536]{0}', space=vmem, size = 0x10000, scoped, tag = 'input window, operand 1, single buffered']
    #allocation7 [shape = 's32[1]{0}', space=sflag, size = 0x4, scoped, tag = 'scoped memory for transformer_block_forward.9']
    #allocation8 [shape = 'u8[512]{0}', space=vmem, size = 0x400, scoped, tag = 'input window, operand 2, single buffered']
    #allocation9 [shape = 'u8[8192]{0}', space=vmem, size = 0x2000, scoped, tag = 'input window, operand 3, single buffered']
    #allocation10 [shape = 's32[1]{0}', space=sflag, size = 0x4, scoped, tag = 'scoped memory for transformer_block_forward.9']
    #allocation11 [shape = 'u8[8192]{0}', space=vmem, size = 0x2000, scoped, tag = 'output window, operand 0, single buffered']
    %9 = vsyncpa [#allocation4], 0
    %10 = vsyncpa [#allocation7], 0
    %11 = vsyncpa [#allocation10], 0
    %12 = vsyncpa [#allocation5], 0
    // Predicated region
    $region2: #{transformer_block_forward.9} parent=1 // pred_check
      _
    $region3: #{transformer_block_forward.9} parent=1 // pred_check_branch
      %14 = sbr.rel (0) target = $region5
    $region4: #{transformer_block_forward.9} parent=1 // pred_region
      %s16 = ssub.s32 256, 256
      %17 = vsyncadd [#allocation4], %s16
      %s18 = sshll.u32 [#allocation3], 4
      %s19 = int_to_ptr.vmem [resolvable:$true] %s18
      %24 = dma.hbm_to_vmem [thread:$0]  %s0, 256, %s19, [#allocation4], 128, 128, 8
    $region5: #{transformer_block_forward.9} parent=1 // pred_fallthru
      _
    // Predicated region
    $region6: #{transformer_block_forward.9} parent=1 // pred_check
      _
    $region7: #{transformer_block_forward.9} parent=1 // pred_check_branch
      %26 = sbr.rel (0) target = $region9
    $region8: #{transformer_block_forward.9} parent=1 // pred_region
      %s28 = ssub.s32 2048, 2048
      %29 = vsyncadd [#allocation7], %s28
      %s30 = sshll.u32 [#allocation6], 4
      %s31 = int_to_ptr.vmem [resolvable:$true] %s30
      %36 = dma.hbm_to_vmem [thread:$0]  %s1, 2048, %s31, [#allocation7], 128, 128, 8
    $region9: #{transformer_block_forward.9} parent=1 // pred_fallthru
      _
    // Predicated region
    $region10: #{transformer_block_forward.9} parent=1 // pred_check
      _
    $region11: #{transformer_block_forward.9} parent=1 // pred_check_branch
      %38 = sbr.rel (0) target = $region13
    $region12: #{transformer_block_forward.9} parent=1 // pred_region
      %s40 = ssub.s32 16, 16
      %41 = vsyncadd [#allocation7], %s40
      %s43 = sshll.u32 [#allocation8], 4
      %s44 = int_to_ptr.vmem [resolvable:$true] %s43
      %46 = dma.hbm_to_vmem [thread:$0]  %s2, 16, %s44, [#allocation7]
    $region13: #{transformer_block_forward.9} parent=1 // pred_fallthru
      _
    // Predicated region
    $region14: #{transformer_block_forward.9} parent=1 // pred_check
      _
    $region15: #{transformer_block_forward.9} parent=1 // pred_check_branch
      %48 = sbr.rel (0) target = $region17
    $region16: #{transformer_block_forward.9} parent=1 // pred_region
      %s50 = ssub.s32 256, 256
      %51 = vsyncadd [#allocation10], %s50
      %s52 = sshll.u32 [#allocation9], 4
      %s53 = int_to_ptr.vmem [resolvable:$true] %s52
      %58 = dma.hbm_to_vmem [thread:$0]  %s3, 256, %s53, [#allocation10], 128, 128, 8
    $region17: #{transformer_block_forward.9} parent=1 // pred_fallthru
      _
    // Predicated region
    $region18: #{transformer_block_forward.9} parent=1 // pred_check
      _
    $region19: #{transformer_block_forward.9} parent=1 // pred_check_branch
      %60 = sbr.rel (0) target = $region21
    $region20: #{transformer_block_forward.9} parent=1 // pred_region
      %61 = dma.done [#allocation4], 256
    $region21: #{transformer_block_forward.9} parent=1 // pred_fallthru
      _
    // Predicated region
    $region22: #{transformer_block_forward.9} parent=1 // pred_check
      _
    $region23: #{transformer_block_forward.9} parent=1 // pred_check_branch
      %63 = sbr.rel (0) target = $region25
    $region24: #{transformer_block_forward.9} parent=1 // pred_region
      %64 = dma.done [#allocation7], 2048
    $region25: #{transformer_block_forward.9} parent=1 // pred_fallthru
      _
    // Predicated region
    $region26: #{transformer_block_forward.9} parent=1 // pred_check
      _
    $region27: #{transformer_block_forward.9} parent=1 // pred_check_branch
      %66 = sbr.rel (0) target = $region29
    $region28: #{transformer_block_forward.9} parent=1 // pred_region
      %67 = dma.done [#allocation7], 16
    $region29: #{transformer_block_forward.9} parent=1 // pred_fallthru
      _
    // Predicated region
    $region30: #{transformer_block_forward.9} parent=1 // pred_check
      _
    $region31: #{transformer_block_forward.9} parent=1 // pred_check_branch
      %69 = sbr.rel (0) target = $region33
    $region32: #{transformer_block_forward.9} parent=1 // pred_region
      %70 = dma.done [#allocation10], 256
    $region33: #{transformer_block_forward.9} parent=1 // pred_fallthru
      _
    %p71 = scmp.eq.s32.totalorder 0, 0
    // Predicated region
    $region34: #{transformer_block_forward.9} parent=1 // pred_check
      %p72 = pneg %p71
    $region35: #{transformer_block_forward.9} parent=1 // pred_check_branch
      %74 = sbr.rel (%p72) target = $region37
    $region36: #{transformer_block_forward.9} parent=1 // pred_region
      %vm75 = vcmask 261120
      %76 = vst.msk [vmem:[#allocation2] sm:$0xff] %vm75, 0.0
      %77 = vst.msk [vmem:[#allocation2 + $0x8] sm:$0xff] %vm75, 0.0
    $region37: #{transformer_block_forward.9} parent=1 // pred_fallthru
      _
    %v78 = vld [vmem:[#allocation2] sm:$0xff]
    %v79 = vld [vmem:[#allocation2 + $0x8] sm:$0xff]
    %v80 = vld [vmem:[#allocation3] sm:$0xff]
    %v81 = vld [vmem:[#allocation3 + $0x8] sm:$0xff]
    %v82 = vld [vmem:[#allocation6] sm:$0xff]
    %v83 = vld [vmem:[#allocation6 + $0x8] sm:$0xff]
    %v84 = vld [vmem:[#allocation6 + $0x10] sm:$0xff]
    %v85 = vld [vmem:[#allocation6 + $0x18] sm:$0xff]
    %v86 = vld [vmem:[#allocation6 + $0x20] sm:$0xff]
    %v87 = vld [vmem:[#allocation6 + $0x28] sm:$0xff]
    %v88 = vld [vmem:[#allocation6 + $0x30] sm:$0xff]
    %v89 = vld [vmem:[#allocation6 + $0x38] sm:$0xff]
    %v90 = vld [vmem:[#allocation6 + $0x40] sm:$0xff]
    %v91 = vld [vmem:[#allocation6 + $0x48] sm:$0xff]
    %v92 = vld [vmem:[#allocation6 + $0x50] sm:$0xff]
    %v93 = vld [vmem:[#allocation6 + $0x58] sm:$0xff]
    %v94 = vld [vmem:[#allocation6 + $0x60] sm:$0xff]
    %v95 = vld [vmem:[#allocation6 + $0x68] sm:$0xff]
    %v96 = vld [vmem:[#allocation6 + $0x70] sm:$0xff]
    %v97 = vld [vmem:[#allocation6 + $0x78] sm:$0xff]
    %98 = vmatprep.subr.mxu0 0.0
    %99 = vmatpush1.msra.mxu0 %v82
    %100 = vmatprep.subr.mxu0 0.0
    %101 = vmatpush1.msra.mxu0 %v83
    %102 = vmatprep.subr.mxu0 0.0
    %103 = vmatpush1.msra.mxu0 %v84
    %104 = vmatprep.subr.mxu0 0.0
    %105 = vmatpush1.msra.mxu0 %v85
    %106 = vmatprep.subr.mxu0 0.0
    %107 = vmatpush1.msra.mxu0 %v86
    %108 = vmatprep.subr.mxu0 0.0
    %109 = vmatpush1.msra.mxu0 %v87
    %110 = vmatprep.subr.mxu0 0.0
    %111 = vmatpush1.msra.mxu0 %v88
    %112 = vmatprep.subr.mxu0 0.0
    %113 = vmatpush1.msra.mxu0 %v89
    %114 = vmatprep.subr.mxu0 0.0
    %115 = vmatpush1.msra.mxu0 %v90
    %116 = vmatprep.subr.mxu0 0.0
    %117 = vmatpush1.msra.mxu0 %v91
    %118 = vmatprep.subr.mxu0 0.0
    %119 = vmatpush1.msra.mxu0 %v92
    %120 = vmatprep.subr.mxu0 0.0
    %121 = vmatpush1.msra.mxu0 %v93
    %122 = vmatprep.subr.mxu0 0.0
    %123 = vmatpush1.msra.mxu0 %v94
    %124 = vmatprep.subr.mxu0 0.0
    %125 = vmatpush1.msra.mxu0 %v95
    %126 = vmatprep.subr.mxu0 0.0
    %127 = vmatpush1.msra.mxu0 %v96
    %128 = vmatprep.subr.mxu0 0.0
    %129 = vmatpush1.msra.mxu0 %v97
    %130 = vmatprep.subr.mxu0 0.0
    %131 = vmatpush1.msra.mxu0 0.0
    %132 = vmatprep.subr.mxu0 0.0
    %133 = vmatpush1.msra.mxu0 0.0
    %134 = vmatprep.subr.mxu0 0.0
    %135 = vmatpush1.msra.mxu0 0.0
    %136 = vmatprep.subr.mxu0 0.0
    %137 = vmatpush1.msra.mxu0 0.0
    %138 = vmatprep.subr.mxu0 0.0
    %139 = vmatpush1.msra.mxu0 0.0
    %140 = vmatprep.subr.mxu0 0.0
    %141 = vmatpush1.msra.mxu0 0.0
    %142 = vmatprep.subr.mxu0 0.0
    %143 = vmatpush1.msra.mxu0 0.0
    %144 = vmatprep.subr.mxu0 0.0
    %145 = vmatpush1.msra.mxu0 0.0
    %146 = vmatprep.subr.mxu0 0.0
    %147 = vmatpush1.msra.mxu0 0.0
    %148 = vmatprep.subr.mxu0 0.0
    %149 = vmatpush1.msra.mxu0 0.0
    %150 = vmatprep.subr.mxu0 0.0
    %151 = vmatpush1.msra.mxu0 0.0
    %152 = vmatprep.subr.mxu0 0.0
    %153 = vmatpush1.msra.mxu0 0.0
    %154 = vmatprep.subr.mxu0 0.0
    %155 = vmatpush1.msra.mxu0 0.0
    %156 = vmatprep.subr.mxu0 0.0
    %157 = vmatpush1.msra.mxu0 0.0
    %158 = vmatprep.subr.mxu0 0.0
    %159 = vmatpush1.msra.mxu0 0.0
    %160 = vmatprep.subr.mxu0 0.0
    %161 = vmatpush1.msra.mxu0 0.0
    %162 = vmatprep.mubr.f32.mxu0 0.0
    %163 = vmatmul.mubr.f32.gmra.mrb[0].mxu0 %v80
    %v164 = vpop.f32.mrb[0].mxu0
    %v165 = vadd.f32 0.0, %v164
    %v166 = vpop.f32.mrb[0].mxu0
    %167 = vmatprep.mubr.f32.mxu0 0.0
    %168 = vmatmul.mubr.f32.gmra.mrb[0].mxu0 %v81
    %v169 = vpop.f32.mrb[0].mxu0
    %v170 = vadd.f32 0.0, %v169
    %v171 = vpop.f32.mrb[0].mxu0
    %172 = vdwg.mxu0
    %v173 = vadd.f32 %v78, %v165
    %v174 = vadd.f32 %v79, %v170
    %vm175 = vcmask 261120
    %176 = vst.msk [vmem:[#allocation2] sm:$0xff] %vm175, %v173
    %177 = vst.msk [vmem:[#allocation2 + $0x8] sm:$0xff] %vm175, %v174
    // Predicated region
    $region38: #{transformer_block_forward.9} parent=1 // pred_check
      %p178 = pneg %p71
    $region39: #{transformer_block_forward.9} parent=1 // pred_check_branch
      %180 = sbr.rel (%p178) target = $region41
    $region40: #{transformer_block_forward.9} parent=1 // pred_region
      %v181 = vld [vmem:[#allocation2] sm:$0xff]
      %v182 = vld [vmem:[#allocation2 + $0x8] sm:$0xff]
      %v183 = vld [vmem:[#allocation8] sm:$0x1]
      %v185 = vlaneseq
      %v186 = vshrl.u32 %v185, 7
      %v187 = vsub.s32 0, %v186
      %v188 = vrot.slane %v183, %v187
      %v190 = vadd.f32 %v181, %v188
      %v191 = vadd.f32 %v182, %v188
      %v192 = vld [vmem:[#allocation9] sm:$0xff]
      %v193 = vld [vmem:[#allocation9 + $0x8] sm:$0xff]
      %v194 = vadd.f32 %v190, %v192
      %v195 = vadd.f32 %v191, %v193
      %196 = vst.msk [vmem:[#allocation11] sm:$0xff] %vm175, %v194
      %197 = vst.msk [vmem:[#allocation11 + $0x8] sm:$0xff] %vm175, %v195
    $region41: #{transformer_block_forward.9} parent=1 // pred_fallthru
      _
    // Predicated region
    $region42: #{transformer_block_forward.9} parent=1 // pred_check
      _
    $region43: #{transformer_block_forward.9} parent=1 // pred_check_branch
      %199 = sbr.rel (0) target = $region45
    $region44: #{transformer_block_forward.9} parent=1 // pred_region
      %s201 = ssub.s32 256, 256
      %202 = vsyncadd [#allocation5], %s201
      %s203 = sshll.u32 [#allocation11], 4
      %s204 = int_to_ptr.vmem [resolvable:$true] %s203
      %209 = dma.vmem_to_hbm [thread:$0]  %s204, 256, %s4, [#allocation5], 128, 128, 8
    $region45: #{transformer_block_forward.9} parent=1 // pred_fallthru
      _
    // Predicated region
    $region46: #{transformer_block_forward.9} parent=1 // pred_check
      _
    $region47: #{transformer_block_forward.9} parent=1 // pred_check_branch
      %211 = sbr.rel (0) target = $region49
    $region48: #{transformer_block_forward.9} parent=1 // pred_region
      %212 = dma.done [#allocation5], 256
    $region49: #{transformer_block_forward.9} parent=1 // pred_fallthru
      _
    %213 = vsyncpa [#allocation4], 1
    %214 = vsyncpa [#allocation7], 1
    %215 = vsyncpa [#allocation10], 1
    %216 = vsyncpa [#allocation5], 1

</llo_original>
